<compile_context>
chip_gen: v5e
topology: v5e:2x2
jax: 0.10.0
libtpu: 0.0.40
codegen_flags: <defaults>
</compile_context>

<pallas_src>
import functools

import jax
import jax.numpy as jnp
from jax.experimental import pallas as pl
from jax.experimental.pallas import tpu as pltpu


def _round_up(x, m):
    return ((x + m - 1) // m) * m


def _pad_to(x, axis, new_size):
    if x.shape[axis] == new_size:
        return x
    pad = [(0, 0)] * x.ndim
    pad[axis] = (0, new_size - x.shape[axis])
    return jnp.pad(x, pad)


def _pad_gate_axis(w, h_dim, hg):
    """Last axis is [r|z|n], each slab of width h_dim; zero-pad each slab to hg."""
    lead = w.shape[:-1]
    w3 = w.reshape(*lead, 3, h_dim)
    w3 = _pad_to(w3, -1, hg)
    return w3.reshape(*lead, 3 * hg)


def _btier_kernel(h0_ref, x_ref, wx_ref, bg_ref, wh_ref, wb_ref, bb_ref,
                  b_out_ref, h_out_ref, gx_sc, h_hist_sc,
                  *, hg, t_blk, seq_len, masked_tail, unroll):
    """One (batch-tile, time-block) grid step of the GRU-style recurrence.

    h0_ref    : (bt, Hg)          f32  initial hidden (this batch tile)
    x_ref     : (t_blk, bt, 3I)   f32  raw [nh|nr|nt] features, time-major
    wx_ref    : (3I, 3Hg)         f32  x-side gate weights
    bg_ref    : (1, 3Hg)          f32  gate bias
    wh_ref    : (Hg, 3Hg)         f32  h-side gate weights
    wb_ref    : (Hg, Bd)          f32  output head weights
    bb_ref    : (1, Bd)           f32  output head bias
    b_out_ref : (t_blk, bt, Bd)   f32  per-step outputs (lane-dense)
    h_out_ref : (bt, Hg)          f32  resident carry / final hidden
    gx_sc     : (t_blk, bt, 3Hg)  f32  scratch: fused x-projection
    h_hist_sc : (t_blk, bt, Hg)   f32  scratch: hidden history for the block
    """
    tb = pl.program_id(1)

    @pl.when(tb == 0)
    def _():
        h_out_ref[...] = h0_ref[...]

    bt = x_ref.shape[1]
    xi = x_ref.shape[2]

    # Fused x-side projection for the whole time block: one dense MXU matmul
    # (parallel over t_blk*bt rows) instead of an HBM-materialized gx tensor.
    x_flat = x_ref[...].reshape(t_blk * bt, xi)
    gx = jnp.dot(x_flat, wx_ref[...],
                 preferred_element_type=jnp.float32) + bg_ref[...]
    gx_sc[...] = gx.reshape(t_blk, bt, 3 * hg)

    def step(tt, h):
        gx_t = gx_sc[tt]                                        # (bt, 3Hg)
        gh = jnp.dot(h, wh_ref[...], preferred_element_type=jnp.float32)
        # Gate slabs are lane-aligned (hg is a multiple of 128).
        r = jax.nn.sigmoid(gx_t[:, 0 * hg:1 * hg] + gh[:, 0 * hg:1 * hg])
        z = jax.nn.sigmoid(gx_t[:, 1 * hg:2 * hg] + gh[:, 1 * hg:2 * hg])
        n = jnp.tanh(gx_t[:, 2 * hg:3 * hg] + r * gh[:, 2 * hg:3 * hg])
        h_new = n + z * (h - n)                                 # == (1-z)*n + z*h
        if masked_tail:
            valid = (tb * t_blk + tt) < seq_len
            h_new = jnp.where(valid, h_new, h)
        h_hist_sc[tt] = h_new
        return h_new

    h_final = jax.lax.fori_loop(0, t_blk, step, h_out_ref[...], unroll=unroll)
    h_out_ref[...] = h_final   # resident (constant index) -> flushed at grid end

    # Output projection hoisted to per-block: one dense MXU matmul and one
    # lane-dense store instead of a tiny matmul + small store per time step.
    hb = h_hist_sc[...].reshape(t_blk * bt, hg)
    b = jnp.dot(hb, wb_ref[...], preferred_element_type=jnp.float32) + bb_ref[...]
    b_out_ref[...] = jnp.tanh(b).reshape(b_out_ref.shape)


def btier_forward(x_tuple, params, hidden=None, *, t_blk=32, batch_tile=None):
    """x_tuple = (nh, nr, nt, _aux); nh/nr/nt: (batch, seq, i_dim).

    Returns (outputs (batch, seq, b_dim), h_last (batch, h_dim)),
    matching the PyTorch BTier convention.
    """
    nh, nr, nt, _ = x_tuple
    batch, seq_len, i_dim = nh.shape
    h_dim = params["wh"].shape[0]
    b_dim = params["wb"].shape[1]
    xi = 3 * i_dim

    hg = _round_up(h_dim, 128)      # lane-aligned per-gate width
    bd = _round_up(b_dim, 128)      # lane-dense output

    # Batch tiling: sublane-full, optionally split for v7x's second TC.
    bp = _round_up(batch, 8)
    if batch_tile is None:
        batch_tile = bp if bp < 16 else _round_up((bp + 1) // 2, 8)
    bt = _round_up(min(batch_tile, bp), 8)
    bp = _round_up(bp, bt)
    nb = bp // bt

    # Time blocking (amortize per-grid-step overhead); partial unroll inside.
    t_blk = max(1, min(t_blk, _round_up(seq_len, 8)))
    s_pad = _round_up(seq_len, t_blk)
    n_blk = s_pad // t_blk
    masked_tail = s_pad != seq_len
    unroll = min(t_blk, 8)

    f32 = jnp.float32

    # ---- pad parameters (f32 everywhere: runtime lacks bf16xbf16=f32 dots) --
    wx_p = _pad_gate_axis(params["wx"].astype(f32), h_dim, hg)            # (3I, 3Hg)
    bg_p = _pad_gate_axis(params["bg"].astype(f32), h_dim, hg)            # (1, 3Hg)
    wh_p = _pad_to(_pad_gate_axis(params["wh"].astype(f32), h_dim, hg),
                   0, hg)                                                 # (Hg, 3Hg)
    wb_p = _pad_to(_pad_to(params["wb"].astype(f32), 0, hg), 1, bd)       # (Hg, Bd)
    bb_p = _pad_to(params["bb"].astype(f32), 1, bd)                       # (1, Bd)

    if hidden is None:
        h0 = jnp.zeros((bp, hg), f32)
    else:
        h0 = _pad_to(_pad_to(hidden.astype(f32), 0, bp), 1, hg)

    # ---- raw-x stream only (no HBM gx intermediate) ------------------------
    x = jnp.concatenate([nh, nr, nt], axis=-1).astype(f32)                # (B, S, 3I)
    x = _pad_to(_pad_to(x, 0, bp), 1, s_pad)                              # (Bp, S_pad, 3I)
    x = jnp.transpose(x, (1, 0, 2))                                       # (S_pad, Bp, 3I)

    # ---- VMEM budget derived from actual buffer sizes (not hardcoded) ------
    est_bytes = 4 * (
        2 * t_blk * bt * xi                    # x block (double-buffered)
        + 2 * t_blk * bt * bd                  # b block (double-buffered)
        + 4 * bt * hg                          # h0 in + h carry out
        + 2 * (xi * 3 * hg + hg * 3 * hg + hg * bd + 3 * hg + bd)  # weights/bias
        + t_blk * bt * (3 * hg + hg)           # gx + h history scratch
    )
    try:
        vmem_cap = int(pltpu.get_tpu_info().vmem_capacity_bytes)
    except Exception:
        vmem_cap = 64 * 1024 * 1024            # assume the smallest (v7x)
    vmem_limit = min(int(0.75 * vmem_cap),
                     max(32 * 1024 * 1024, int(1.5 * est_bytes)))

    kernel = functools.partial(_btier_kernel, hg=hg, t_blk=t_blk,
                               seq_len=seq_len, masked_tail=masked_tail,
                               unroll=unroll)

    b_seq, h_last = pl.pallas_call(
        kernel,
        out_shape=(
            jax.ShapeDtypeStruct((s_pad, bp, bd), f32),
            jax.ShapeDtypeStruct((bp, hg), f32),
        ),
        grid_spec=pltpu.PrefetchScalarGridSpec(
            num_scalar_prefetch=0,
            grid=(nb, n_blk),
            in_specs=[
                pl.BlockSpec((bt, hg), lambda bi, tb: (bi, 0)),            # h0
                pl.BlockSpec((t_blk, bt, xi), lambda bi, tb: (tb, bi, 0)),  # raw x
                pl.BlockSpec((xi, 3 * hg), lambda bi, tb: (0, 0)),          # Wx
                pl.BlockSpec((1, 3 * hg), lambda bi, tb: (0, 0)),           # bg
                pl.BlockSpec((hg, 3 * hg), lambda bi, tb: (0, 0)),          # Wh
                pl.BlockSpec((hg, bd), lambda bi, tb: (0, 0)),              # Wb
                pl.BlockSpec((1, bd), lambda bi, tb: (0, 0)),               # bb
            ],
            out_specs=[
                pl.BlockSpec((t_blk, bt, bd), lambda bi, tb: (tb, bi, 0)),  # b blocks
                pl.BlockSpec((bt, hg), lambda bi, tb: (bi, 0)),             # final h
            ],
            scratch_shapes=[
                pltpu.VMEM((t_blk, bt, 3 * hg), f32),   # fused gx for this block
                pltpu.VMEM((t_blk, bt, hg), f32),       # hidden history
            ],
        ),
        compiler_params=pltpu.CompilerParams(
            dimension_semantics=("parallel", "arbitrary"),  # batch || , time serial
            vmem_limit_bytes=vmem_limit,
        ),
    )(h0, x, wx_p, bg_p, wh_p, wb_p, bb_p)

    outputs = jnp.transpose(b_seq, (1, 0, 2))[:batch, :seq_len, :b_dim]
    h_last = h_last[:batch, :h_dim]
    return outputs, h_last


def _reference_forward(x_tuple, params, hidden=None):
    """Pure-JAX (f32) reference mirroring the per-step BCell math."""
    nh, nr, nt, _ = x_tuple
    batch, seq_len, _ = nh.shape
    h_dim = params["wh"].shape[0]
    wx = params["wx"].astype(jnp.float32)
    wh = params["wh"].astype(jnp.float32)
    wb = params["wb"].astype(jnp.float32)
    bg = params["bg"].astype(jnp.float32)
    bb = params["bb"].astype(jnp.float32)

    h = (jnp.zeros((batch, h_dim), jnp.float32) if hidden is None
         else hidden.astype(jnp.float32))
    xcat = jnp.concatenate([nh, nr, nt], axis=-1).astype(jnp.float32)

    def step(h, x_t):
        gx = x_t @ wx + bg
        gh = h @ wh
        r = jax.nn.sigmoid(gx[:, :h_dim] + gh[:, :h_dim])
        z = jax.nn.sigmoid(gx[:, h_dim:2 * h_dim] + gh[:, h_dim:2 * h_dim])
        n = jnp.tanh(gx[:, 2 * h_dim:] + r * gh[:, 2 * h_dim:])
        h_new = (1.0 - z) * n + z * h
        b = jnp.tanh(h_new @ wb + bb)
        return h_new, b

    h_last, bs = jax.lax.scan(step, h, jnp.transpose(xcat, (1, 0, 2)))
    return jnp.transpose(bs, (1, 0, 2)), h_last


def init_params(i_dim, h_dim, b_dim, key):
    k1, k2, k3 = jax.random.split(key, 3)
    scale_x = 1.0 / jnp.sqrt(3.0 * i_dim)
    scale_h = 1.0 / jnp.sqrt(float(h_dim))
    return {
        "wx": jax.random.normal(k1, (3 * i_dim, 3 * h_dim), jnp.float32) * scale_x,
        "wh": jax.random.normal(k2, (h_dim, 3 * h_dim), jnp.float32) * scale_h,
        "bg": jnp.zeros((1, 3 * h_dim), jnp.float32),
        "wb": jax.random.normal(k3, (h_dim, b_dim), jnp.float32) * scale_h,
        "bb": jnp.zeros((1, b_dim), jnp.float32),
    }


def _run_case(key, batch, seq_len, i_dim, h_dim, b_dim, with_hidden):
    kp, k_nh, k_nr, k_nt, k_h = jax.random.split(key, 5)
    params = init_params(i_dim, h_dim, b_dim, kp)
    nh = jax.random.normal(k_nh, (batch, seq_len, i_dim), jnp.float32)
    nr = jax.random.normal(k_nr, (batch, seq_len, i_dim), jnp.float32)
    nt = jax.random.normal(k_nt, (batch, seq_len, i_dim), jnp.float32)
    hidden = (jax.random.normal(k_h, (batch, h_dim), jnp.float32)
              if with_hidden else None)
    x_tuple = (nh, nr, nt, None)

    outputs, h_last = btier_forward(x_tuple, params, hidden)
    jax.block_until_ready((outputs, h_last))

    ref_out, ref_h = _reference_forward(x_tuple, params, hidden)
    assert outputs.shape == (batch, seq_len, b_dim)
    assert h_last.shape == (batch, h_dim)
    assert jnp.allclose(outputs, ref_out, atol=2e-3, rtol=2e-3)
    assert jnp.allclose(h_last, ref_h, atol=2e-3, rtol=2e-3)


if __name__ == "__main__":
    key = jax.random.PRNGKey(0)
    k1, k2 = jax.random.split(key)

    # Main case: shapes consistent with the module.
    _run_case(k1, batch=2, seq_len=8, i_dim=16, h_dim=32, b_dim=32,
              with_hidden=False)
    # Ragged case: exercises batch/lane/time-tail padding and a provided hidden.
    _run_case(k2, batch=3, seq_len=6, i_dim=8, h_dim=20, b_dim=12,
              with_hidden=True)

    print("KERNEL_OK")
</pallas_src>

<mosaic_0001>
module attributes {stable_mosaic.version = 11 : i64} {
  func.func @_btier_kernel(%arg0: i32, %arg1: i32, %arg2: memref<8x128xf32, #tpu.memory_space<vmem>>, %arg3: memref<8x8x48xf32, #tpu.memory_space<vmem>>, %arg4: memref<48x384xf32, #tpu.memory_space<vmem>>, %arg5: memref<1x384xf32, #tpu.memory_space<vmem>>, %arg6: memref<128x384xf32, #tpu.memory_space<vmem>>, %arg7: memref<128x128xf32, #tpu.memory_space<vmem>>, %arg8: memref<1x128xf32, #tpu.memory_space<vmem>>, %arg9: memref<8x8x128xf32, #tpu.memory_space<vmem>>, %arg10: memref<8x128xf32, #tpu.memory_space<vmem>>, %arg11: memref<8x8x384xf32, #tpu.memory_space<vmem>>, %arg12: memref<8x8x128xf32, #tpu.memory_space<vmem>>) attributes {dimension_semantics = [#tpu.dimension_semantics<parallel>, #tpu.dimension_semantics<arbitrary>], iteration_bounds = array<i64: 1, 1>, scalar_prefetch = 0 : i64, scratch_operands = 2 : i64, tpu.core_type = #tpu.core_type<tc>, window_params = [{transform_indices = @transform_0, window_bounds = array<i64: 8, 128>}, {transform_indices = @transform_1, window_bounds = array<i64: 8, 8, 48>}, {pipeline_mode = #tpu.pipeline_mode<synchronous>, transform_indices = @transform_2, window_bounds = array<i64: 48, 384>}, {pipeline_mode = #tpu.pipeline_mode<synchronous>, transform_indices = @transform_3, window_bounds = array<i64: 1, 384>}, {pipeline_mode = #tpu.pipeline_mode<synchronous>, transform_indices = @transform_4, window_bounds = array<i64: 128, 384>}, {pipeline_mode = #tpu.pipeline_mode<synchronous>, transform_indices = @transform_5, window_bounds = array<i64: 128, 128>}, {pipeline_mode = #tpu.pipeline_mode<synchronous>, transform_indices = @transform_6, window_bounds = array<i64: 1, 128>}, {transform_indices = @transform_7, window_bounds = array<i64: 8, 8, 128>}, {transform_indices = @transform_8, window_bounds = array<i64: 8, 128>}]} {
    %c0_i32 = arith.constant 0 : i32
    %0 = arith.cmpi eq, %arg1, %c0_i32 : i32
    %1 = arith.extui %0 : i1 to i32
    %c0_i32_0 = arith.constant 0 : i32
    %2 = arith.cmpi ne, %1, %c0_i32_0 : i32
    scf.if %2 {
      %c0_98 = arith.constant 0 : index
      %c0_99 = arith.constant 0 : index
      %288 = vector.load %arg2[%c0_98, %c0_99] : memref<8x128xf32, #tpu.memory_space<vmem>>, vector<8x128xf32>
      %c0_100 = arith.constant 0 : index
      %c0_101 = arith.constant 0 : index
      %289 = vector.load %arg10[%c0_100, %c0_101] : memref<8x128xf32, #tpu.memory_space<vmem>>, vector<8x128xf32>
      tpu.vector_store %arg10[%c0_100, %c0_101], %288 {strides = array<i32>} : memref<8x128xf32, #tpu.memory_space<vmem>>, vector<8x128xf32>,
    } else {
    }
    %c0 = arith.constant 0 : index
    %c0_1 = arith.constant 0 : index
    %c0_2 = arith.constant 0 : index
    %3 = vector.load %arg3[%c0, %c0_1, %c0_2] : memref<8x8x48xf32, #tpu.memory_space<vmem>>, vector<8x8x48xf32>
    %4 = vector.shape_cast %3 : vector<8x8x48xf32> to vector<64x48xf32>
    %c0_3 = arith.constant 0 : index
    %c0_4 = arith.constant 0 : index
    %5 = vector.load %arg4[%c0_3, %c0_4] : memref<48x384xf32, #tpu.memory_space<vmem>>, vector<48x384xf32>
    %cst = arith.constant dense<0.000000e+00> : vector<64x384xf32>
    %6 = tpu.matmul %4, %5, %cst {dimension_numbers = #tpu.dot_dimension_numbers<[1], [0], [0], [1], [0, 0, 1, 1], [], []>} : vector<64x48xf32>, vector<48x384xf32>, vector<64x384xf32> -> vector<64x384xf32>
    %c0_5 = arith.constant 0 : index
    %c0_6 = arith.constant 0 : index
    %7 = vector.load %arg5[%c0_5, %c0_6] : memref<1x384xf32, #tpu.memory_space<vmem>>, vector<1x384xf32>
    %8 = vector.broadcast %7 : vector<1x384xf32> to vector<64x384xf32>
    %9 = arith.addf %6, %8 : vector<64x384xf32>
    %10 = vector.shape_cast %9 : vector<64x384xf32> to vector<8x8x384xf32>
    %c0_7 = arith.constant 0 : index
    %c0_8 = arith.constant 0 : index
    %c0_9 = arith.constant 0 : index
    %11 = vector.load %arg11[%c0_7, %c0_8, %c0_9] : memref<8x8x384xf32, #tpu.memory_space<vmem>>, vector<8x8x384xf32>
    tpu.vector_store %arg11[%c0_7, %c0_8, %c0_9], %10 {strides = array<i32>} : memref<8x8x384xf32, #tpu.memory_space<vmem>>, vector<8x8x384xf32>,
    %c0_10 = arith.constant 0 : index
    %c0_11 = arith.constant 0 : index
    %12 = vector.load %arg10[%c0_10, %c0_11] : memref<8x128xf32, #tpu.memory_space<vmem>>, vector<8x128xf32>
    %c0_i32_12 = arith.constant 0 : i32
    %13 = arith.index_cast %c0_i32_12 : i32 to index
    %c0_13 = arith.constant 0 : index
    %c0_14 = arith.constant 0 : index
    %14 = vector.load %arg11[%13, %c0_13, %c0_14] : memref<8x8x384xf32, #tpu.memory_space<vmem>>, vector<1x8x384xf32>
    %15 = vector.shape_cast %14 : vector<1x8x384xf32> to vector<8x384xf32>
    %c0_15 = arith.constant 0 : index
    %c0_16 = arith.constant 0 : index
    %16 = vector.load %arg6[%c0_15, %c0_16] : memref<128x384xf32, #tpu.memory_space<vmem>>, vector<128x384xf32>
    %cst_17 = arith.constant dense<0.000000e+00> : vector<8x384xf32>
    %17 = tpu.matmul %12, %16, %cst_17 {dimension_numbers = #tpu.dot_dimension_numbers<[1], [0], [0], [1], [0, 0, 1, 1], [], []>} : vector<8x128xf32>, vector<128x384xf32>, vector<8x384xf32> -> vector<8x384xf32>
    %18 = vector.extract_strided_slice %15 {offsets = [0, 0], sizes = [8, 128], strides = [1, 1]} : vector<8x384xf32> to vector<8x128xf32>
    %19 = vector.extract_strided_slice %17 {offsets = [0, 0], sizes = [8, 128], strides = [1, 1]} : vector<8x384xf32> to vector<8x128xf32>
    %20 = arith.addf %18, %19 : vector<8x128xf32>
    %21 = arith.negf %20 : vector<8x128xf32>
    %22 = math.exp %21 : vector<8x128xf32>
    %cst_18 = arith.constant 1.000000e+00 : f32
    %23 = vector.broadcast %cst_18 : f32 to vector<8x128xf32>
    %24 = arith.addf %23, %22 : vector<8x128xf32>
    %25 = arith.divf %23, %24 : vector<8x128xf32>
    %26 = vector.extract_strided_slice %15 {offsets = [0, 128], sizes = [8, 128], strides = [1, 1]} : vector<8x384xf32> to vector<8x128xf32>
    %27 = vector.extract_strided_slice %17 {offsets = [0, 128], sizes = [8, 128], strides = [1, 1]} : vector<8x384xf32> to vector<8x128xf32>
    %28 = arith.addf %26, %27 : vector<8x128xf32>
    %29 = arith.negf %28 : vector<8x128xf32>
    %30 = math.exp %29 : vector<8x128xf32>
    %cst_19 = arith.constant 1.000000e+00 : f32
    %31 = vector.broadcast %cst_19 : f32 to vector<8x128xf32>
    %32 = arith.addf %31, %30 : vector<8x128xf32>
    %33 = arith.divf %31, %32 : vector<8x128xf32>
    %34 = vector.extract_strided_slice %15 {offsets = [0, 256], sizes = [8, 128], strides = [1, 1]} : vector<8x384xf32> to vector<8x128xf32>
    %35 = vector.extract_strided_slice %17 {offsets = [0, 256], sizes = [8, 128], strides = [1, 1]} : vector<8x384xf32> to vector<8x128xf32>
    %36 = arith.mulf %25, %35 : vector<8x128xf32>
    %37 = arith.addf %34, %36 : vector<8x128xf32>
    %38 = math.tanh %37 : vector<8x128xf32>
    %39 = arith.subf %12, %38 : vector<8x128xf32>
    %40 = arith.mulf %33, %39 : vector<8x128xf32>
    %41 = arith.addf %38, %40 : vector<8x128xf32>
    %42 = arith.index_cast %c0_i32_12 : i32 to index
    %c0_20 = arith.constant 0 : index
    %c0_21 = arith.constant 0 : index
    %43 = vector.load %arg12[%42, %c0_20, %c0_21] : memref<8x8x128xf32, #tpu.memory_space<vmem>>, vector<1x8x128xf32>
    %44 = vector.shape_cast %43 : vector<1x8x128xf32> to vector<8x128xf32>
    %45 = vector.shape_cast %41 : vector<8x128xf32> to vector<1x8x128xf32>
    tpu.vector_store %arg12[%42, %c0_20, %c0_21], %45 {strides = array<i32>} : memref<8x8x128xf32, #tpu.memory_space<vmem>>, vector<1x8x128xf32>,
    %c1_i32 = arith.constant 1 : i32
    %46 = arith.index_cast %c1_i32 : i32 to index
    %c0_22 = arith.constant 0 : index
    %c0_23 = arith.constant 0 : index
    %47 = vector.load %arg11[%46, %c0_22, %c0_23] : memref<8x8x384xf32, #tpu.memory_space<vmem>>, vector<1x8x384xf32>
    %48 = vector.shape_cast %47 : vector<1x8x384xf32> to vector<8x384xf32>
    %c0_24 = arith.constant 0 : index
    %c0_25 = arith.constant 0 : index
    %49 = vector.load %arg6[%c0_24, %c0_25] : memref<128x384xf32, #tpu.memory_space<vmem>>, vector<128x384xf32>
    %cst_26 = arith.constant dense<0.000000e+00> : vector<8x384xf32>
    %50 = tpu.matmul %41, %49, %cst_26 {dimension_numbers = #tpu.dot_dimension_numbers<[1], [0], [0], [1], [0, 0, 1, 1], [], []>} : vector<8x128xf32>, vector<128x384xf32>, vector<8x384xf32> -> vector<8x384xf32>
    %51 = vector.extract_strided_slice %48 {offsets = [0, 0], sizes = [8, 128], strides = [1, 1]} : vector<8x384xf32> to vector<8x128xf32>
    %52 = vector.extract_strided_slice %50 {offsets = [0, 0], sizes = [8, 128], strides = [1, 1]} : vector<8x384xf32> to vector<8x128xf32>
    %53 = arith.addf %51, %52 : vector<8x128xf32>
    %54 = arith.negf %53 : vector<8x128xf32>
    %55 = math.exp %54 : vector<8x128xf32>
    %cst_27 = arith.constant 1.000000e+00 : f32
    %56 = vector.broadcast %cst_27 : f32 to vector<8x128xf32>
    %57 = arith.addf %56, %55 : vector<8x128xf32>
    %58 = arith.divf %56, %57 : vector<8x128xf32>
    %59 = vector.extract_strided_slice %48 {offsets = [0, 128], sizes = [8, 128], strides = [1, 1]} : vector<8x384xf32> to vector<8x128xf32>
    %60 = vector.extract_strided_slice %50 {offsets = [0, 128], sizes = [8, 128], strides = [1, 1]} : vector<8x384xf32> to vector<8x128xf32>
    %61 = arith.addf %59, %60 : vector<8x128xf32>
    %62 = arith.negf %61 : vector<8x128xf32>
    %63 = math.exp %62 : vector<8x128xf32>
    %cst_28 = arith.constant 1.000000e+00 : f32
    %64 = vector.broadcast %cst_28 : f32 to vector<8x128xf32>
    %65 = arith.addf %64, %63 : vector<8x128xf32>
    %66 = arith.divf %64, %65 : vector<8x128xf32>
    %67 = vector.extract_strided_slice %48 {offsets = [0, 256], sizes = [8, 128], strides = [1, 1]} : vector<8x384xf32> to vector<8x128xf32>
    %68 = vector.extract_strided_slice %50 {offsets = [0, 256], sizes = [8, 128], strides = [1, 1]} : vector<8x384xf32> to vector<8x128xf32>
    %69 = arith.mulf %58, %68 : vector<8x128xf32>
    %70 = arith.addf %67, %69 : vector<8x128xf32>
    %71 = math.tanh %70 : vector<8x128xf32>
    %72 = arith.subf %41, %71 : vector<8x128xf32>
    %73 = arith.mulf %66, %72 : vector<8x128xf32>
    %74 = arith.addf %71, %73 : vector<8x128xf32>
    %75 = arith.index_cast %c1_i32 : i32 to index
    %c0_29 = arith.constant 0 : index
    %c0_30 = arith.constant 0 : index
    %76 = vector.load %arg12[%75, %c0_29, %c0_30] : memref<8x8x128xf32, #tpu.memory_space<vmem>>, vector<1x8x128xf32>
    %77 = vector.shape_cast %76 : vector<1x8x128xf32> to vector<8x128xf32>
    %78 = vector.shape_cast %74 : vector<8x128xf32> to vector<1x8x128xf32>
    tpu.vector_store %arg12[%75, %c0_29, %c0_30], %78 {strides = array<i32>} : memref<8x8x128xf32, #tpu.memory_space<vmem>>, vector<1x8x128xf32>,
    %c2_i32 = arith.constant 2 : i32
    %79 = arith.index_cast %c2_i32 : i32 to index
    %c0_31 = arith.constant 0 : index
    %c0_32 = arith.constant 0 : index
    %80 = vector.load %arg11[%79, %c0_31, %c0_32] : memref<8x8x384xf32, #tpu.memory_space<vmem>>, vector<1x8x384xf32>
    %81 = vector.shape_cast %80 : vector<1x8x384xf32> to vector<8x384xf32>
    %c0_33 = arith.constant 0 : index
    %c0_34 = arith.constant 0 : index
    %82 = vector.load %arg6[%c0_33, %c0_34] : memref<128x384xf32, #tpu.memory_space<vmem>>, vector<128x384xf32>
    %cst_35 = arith.constant dense<0.000000e+00> : vector<8x384xf32>
    %83 = tpu.matmul %74, %82, %cst_35 {dimension_numbers = #tpu.dot_dimension_numbers<[1], [0], [0], [1], [0, 0, 1, 1], [], []>} : vector<8x128xf32>, vector<128x384xf32>, vector<8x384xf32> -> vector<8x384xf32>
    %84 = vector.extract_strided_slice %81 {offsets = [0, 0], sizes = [8, 128], strides = [1, 1]} : vector<8x384xf32> to vector<8x128xf32>
    %85 = vector.extract_strided_slice %83 {offsets = [0, 0], sizes = [8, 128], strides = [1, 1]} : vector<8x384xf32> to vector<8x128xf32>
    %86 = arith.addf %84, %85 : vector<8x128xf32>
    %87 = arith.negf %86 : vector<8x128xf32>
    %88 = math.exp %87 : vector<8x128xf32>
    %cst_36 = arith.constant 1.000000e+00 : f32
    %89 = vector.broadcast %cst_36 : f32 to vector<8x128xf32>
    %90 = arith.addf %89, %88 : vector<8x128xf32>
    %91 = arith.divf %89, %90 : vector<8x128xf32>
    %92 = vector.extract_strided_slice %81 {offsets = [0, 128], sizes = [8, 128], strides = [1, 1]} : vector<8x384xf32> to vector<8x128xf32>
    %93 = vector.extract_strided_slice %83 {offsets = [0, 128], sizes = [8, 128], strides = [1, 1]} : vector<8x384xf32> to vector<8x128xf32>
    %94 = arith.addf %92, %93 : vector<8x128xf32>
    %95 = arith.negf %94 : vector<8x128xf32>
    %96 = math.exp %95 : vector<8x128xf32>
    %cst_37 = arith.constant 1.000000e+00 : f32
    %97 = vector.broadcast %cst_37 : f32 to vector<8x128xf32>
    %98 = arith.addf %97, %96 : vector<8x128xf32>
    %99 = arith.divf %97, %98 : vector<8x128xf32>
    %100 = vector.extract_strided_slice %81 {offsets = [0, 256], sizes = [8, 128], strides = [1, 1]} : vector<8x384xf32> to vector<8x128xf32>
    %101 = vector.extract_strided_slice %83 {offsets = [0, 256], sizes = [8, 128], strides = [1, 1]} : vector<8x384xf32> to vector<8x128xf32>
    %102 = arith.mulf %91, %101 : vector<8x128xf32>
    %103 = arith.addf %100, %102 : vector<8x128xf32>
    %104 = math.tanh %103 : vector<8x128xf32>
    %105 = arith.subf %74, %104 : vector<8x128xf32>
    %106 = arith.mulf %99, %105 : vector<8x128xf32>
    %107 = arith.addf %104, %106 : vector<8x128xf32>
    %108 = arith.index_cast %c2_i32 : i32 to index
    %c0_38 = arith.constant 0 : index
    %c0_39 = arith.constant 0 : index
    %109 = vector.load %arg12[%108, %c0_38, %c0_39] : memref<8x8x128xf32, #tpu.memory_space<vmem>>, vector<1x8x128xf32>
    %110 = vector.shape_cast %109 : vector<1x8x128xf32> to vector<8x128xf32>
    %111 = vector.shape_cast %107 : vector<8x128xf32> to vector<1x8x128xf32>
    tpu.vector_store %arg12[%108, %c0_38, %c0_39], %111 {strides = array<i32>} : memref<8x8x128xf32, #tpu.memory_space<vmem>>, vector<1x8x128xf32>,
    %c3_i32 = arith.constant 3 : i32
    %112 = arith.index_cast %c3_i32 : i32 to index
    %c0_40 = arith.constant 0 : index
    %c0_41 = arith.constant 0 : index
    %113 = vector.load %arg11[%112, %c0_40, %c0_41] : memref<8x8x384xf32, #tpu.memory_space<vmem>>, vector<1x8x384xf32>
    %114 = vector.shape_cast %113 : vector<1x8x384xf32> to vector<8x384xf32>
    %c0_42 = arith.constant 0 : index
    %c0_43 = arith.constant 0 : index
    %115 = vector.load %arg6[%c0_42, %c0_43] : memref<128x384xf32, #tpu.memory_space<vmem>>, vector<128x384xf32>
    %cst_44 = arith.constant dense<0.000000e+00> : vector<8x384xf32>
    %116 = tpu.matmul %107, %115, %cst_44 {dimension_numbers = #tpu.dot_dimension_numbers<[1], [0], [0], [1], [0, 0, 1, 1], [], []>} : vector<8x128xf32>, vector<128x384xf32>, vector<8x384xf32> -> vector<8x384xf32>
    %117 = vector.extract_strided_slice %114 {offsets = [0, 0], sizes = [8, 128], strides = [1, 1]} : vector<8x384xf32> to vector<8x128xf32>
    %118 = vector.extract_strided_slice %116 {offsets = [0, 0], sizes = [8, 128], strides = [1, 1]} : vector<8x384xf32> to vector<8x128xf32>
    %119 = arith.addf %117, %118 : vector<8x128xf32>
    %120 = arith.negf %119 : vector<8x128xf32>
    %121 = math.exp %120 : vector<8x128xf32>
    %cst_45 = arith.constant 1.000000e+00 : f32
    %122 = vector.broadcast %cst_45 : f32 to vector<8x128xf32>
    %123 = arith.addf %122, %121 : vector<8x128xf32>
    %124 = arith.divf %122, %123 : vector<8x128xf32>
    %125 = vector.extract_strided_slice %114 {offsets = [0, 128], sizes = [8, 128], strides = [1, 1]} : vector<8x384xf32> to vector<8x128xf32>
    %126 = vector.extract_strided_slice %116 {offsets = [0, 128], sizes = [8, 128], strides = [1, 1]} : vector<8x384xf32> to vector<8x128xf32>
    %127 = arith.addf %125, %126 : vector<8x128xf32>
    %128 = arith.negf %127 : vector<8x128xf32>
    %129 = math.exp %128 : vector<8x128xf32>
    %cst_46 = arith.constant 1.000000e+00 : f32
    %130 = vector.broadcast %cst_46 : f32 to vector<8x128xf32>
    %131 = arith.addf %130, %129 : vector<8x128xf32>
    %132 = arith.divf %130, %131 : vector<8x128xf32>
    %133 = vector.extract_strided_slice %114 {offsets = [0, 256], sizes = [8, 128], strides = [1, 1]} : vector<8x384xf32> to vector<8x128xf32>
    %134 = vector.extract_strided_slice %116 {offsets = [0, 256], sizes = [8, 128], strides = [1, 1]} : vector<8x384xf32> to vector<8x128xf32>
    %135 = arith.mulf %124, %134 : vector<8x128xf32>
    %136 = arith.addf %133, %135 : vector<8x128xf32>
    %137 = math.tanh %136 : vector<8x128xf32>
    %138 = arith.subf %107, %137 : vector<8x128xf32>
    %139 = arith.mulf %132, %138 : vector<8x128xf32>
    %140 = arith.addf %137, %139 : vector<8x128xf32>
    %141 = arith.index_cast %c3_i32 : i32 to index
    %c0_47 = arith.constant 0 : index
    %c0_48 = arith.constant 0 : index
    %142 = vector.load %arg12[%141, %c0_47, %c0_48] : memref<8x8x128xf32, #tpu.memory_space<vmem>>, vector<1x8x128xf32>
    %143 = vector.shape_cast %142 : vector<1x8x128xf32> to vector<8x128xf32>
    %144 = vector.shape_cast %140 : vector<8x128xf32> to vector<1x8x128xf32>
    tpu.vector_store %arg12[%141, %c0_47, %c0_48], %144 {strides = array<i32>} : memref<8x8x128xf32, #tpu.memory_space<vmem>>, vector<1x8x128xf32>,
    %c4_i32 = arith.constant 4 : i32
    %145 = arith.index_cast %c4_i32 : i32 to index
    %c0_49 = arith.constant 0 : index
    %c0_50 = arith.constant 0 : index
    %146 = vector.load %arg11[%145, %c0_49, %c0_50] : memref<8x8x384xf32, #tpu.memory_space<vmem>>, vector<1x8x384xf32>
    %147 = vector.shape_cast %146 : vector<1x8x384xf32> to vector<8x384xf32>
    %c0_51 = arith.constant 0 : index
    %c0_52 = arith.constant 0 : index
    %148 = vector.load %arg6[%c0_51, %c0_52] : memref<128x384xf32, #tpu.memory_space<vmem>>, vector<128x384xf32>
    %cst_53 = arith.constant dense<0.000000e+00> : vector<8x384xf32>
    %149 = tpu.matmul %140, %148, %cst_53 {dimension_numbers = #tpu.dot_dimension_numbers<[1], [0], [0], [1], [0, 0, 1, 1], [], []>} : vector<8x128xf32>, vector<128x384xf32>, vector<8x384xf32> -> vector<8x384xf32>
    %150 = vector.extract_strided_slice %147 {offsets = [0, 0], sizes = [8, 128], strides = [1, 1]} : vector<8x384xf32> to vector<8x128xf32>
    %151 = vector.extract_strided_slice %149 {offsets = [0, 0], sizes = [8, 128], strides = [1, 1]} : vector<8x384xf32> to vector<8x128xf32>
    %152 = arith.addf %150, %151 : vector<8x128xf32>
    %153 = arith.negf %152 : vector<8x128xf32>
    %154 = math.exp %153 : vector<8x128xf32>
    %cst_54 = arith.constant 1.000000e+00 : f32
    %155 = vector.broadcast %cst_54 : f32 to vector<8x128xf32>
    %156 = arith.addf %155, %154 : vector<8x128xf32>
    %157 = arith.divf %155, %156 : vector<8x128xf32>
    %158 = vector.extract_strided_slice %147 {offsets = [0, 128], sizes = [8, 128], strides = [1, 1]} : vector<8x384xf32> to vector<8x128xf32>
    %159 = vector.extract_strided_slice %149 {offsets = [0, 128], sizes = [8, 128], strides = [1, 1]} : vector<8x384xf32> to vector<8x128xf32>
    %160 = arith.addf %158, %159 : vector<8x128xf32>
    %161 = arith.negf %160 : vector<8x128xf32>
    %162 = math.exp %161 : vector<8x128xf32>
    %cst_55 = arith.constant 1.000000e+00 : f32
    %163 = vector.broadcast %cst_55 : f32 to vector<8x128xf32>
    %164 = arith.addf %163, %162 : vector<8x128xf32>
    %165 = arith.divf %163, %164 : vector<8x128xf32>
    %166 = vector.extract_strided_slice %147 {offsets = [0, 256], sizes = [8, 128], strides = [1, 1]} : vector<8x384xf32> to vector<8x128xf32>
    %167 = vector.extract_strided_slice %149 {offsets = [0, 256], sizes = [8, 128], strides = [1, 1]} : vector<8x384xf32> to vector<8x128xf32>
    %168 = arith.mulf %157, %167 : vector<8x128xf32>
    %169 = arith.addf %166, %168 : vector<8x128xf32>
    %170 = math.tanh %169 : vector<8x128xf32>
    %171 = arith.subf %140, %170 : vector<8x128xf32>
    %172 = arith.mulf %165, %171 : vector<8x128xf32>
    %173 = arith.addf %170, %172 : vector<8x128xf32>
    %174 = arith.index_cast %c4_i32 : i32 to index
    %c0_56 = arith.constant 0 : index
    %c0_57 = arith.constant 0 : index
    %175 = vector.load %arg12[%174, %c0_56, %c0_57] : memref<8x8x128xf32, #tpu.memory_space<vmem>>, vector<1x8x128xf32>
    %176 = vector.shape_cast %175 : vector<1x8x128xf32> to vector<8x128xf32>
    %177 = vector.shape_cast %173 : vector<8x128xf32> to vector<1x8x128xf32>
    tpu.vector_store %arg12[%174, %c0_56, %c0_57], %177 {strides = array<i32>} : memref<8x8x128xf32, #tpu.memory_space<vmem>>, vector<1x8x128xf32>,
    %c5_i32 = arith.constant 5 : i32
    %178 = arith.index_cast %c5_i32 : i32 to index
    %c0_58 = arith.constant 0 : index
    %c0_59 = arith.constant 0 : index
    %179 = vector.load %arg11[%178, %c0_58, %c0_59] : memref<8x8x384xf32, #tpu.memory_space<vmem>>, vector<1x8x384xf32>
    %180 = vector.shape_cast %179 : vector<1x8x384xf32> to vector<8x384xf32>
    %c0_60 = arith.constant 0 : index
    %c0_61 = arith.constant 0 : index
    %181 = vector.load %arg6[%c0_60, %c0_61] : memref<128x384xf32, #tpu.memory_space<vmem>>, vector<128x384xf32>
    %cst_62 = arith.constant dense<0.000000e+00> : vector<8x384xf32>
    %182 = tpu.matmul %173, %181, %cst_62 {dimension_numbers = #tpu.dot_dimension_numbers<[1], [0], [0], [1], [0, 0, 1, 1], [], []>} : vector<8x128xf32>, vector<128x384xf32>, vector<8x384xf32> -> vector<8x384xf32>
    %183 = vector.extract_strided_slice %180 {offsets = [0, 0], sizes = [8, 128], strides = [1, 1]} : vector<8x384xf32> to vector<8x128xf32>
    %184 = vector.extract_strided_slice %182 {offsets = [0, 0], sizes = [8, 128], strides = [1, 1]} : vector<8x384xf32> to vector<8x128xf32>
    %185 = arith.addf %183, %184 : vector<8x128xf32>
    %186 = arith.negf %185 : vector<8x128xf32>
    %187 = math.exp %186 : vector<8x128xf32>
    %cst_63 = arith.constant 1.000000e+00 : f32
    %188 = vector.broadcast %cst_63 : f32 to vector<8x128xf32>
    %189 = arith.addf %188, %187 : vector<8x128xf32>
    %190 = arith.divf %188, %189 : vector<8x128xf32>
    %191 = vector.extract_strided_slice %180 {offsets = [0, 128], sizes = [8, 128], strides = [1, 1]} : vector<8x384xf32> to vector<8x128xf32>
    %192 = vector.extract_strided_slice %182 {offsets = [0, 128], sizes = [8, 128], strides = [1, 1]} : vector<8x384xf32> to vector<8x128xf32>
    %193 = arith.addf %191, %192 : vector<8x128xf32>
    %194 = arith.negf %193 : vector<8x128xf32>
    %195 = math.exp %194 : vector<8x128xf32>
    %cst_64 = arith.constant 1.000000e+00 : f32
    %196 = vector.broadcast %cst_64 : f32 to vector<8x128xf32>
    %197 = arith.addf %196, %195 : vector<8x128xf32>
    %198 = arith.divf %196, %197 : vector<8x128xf32>
    %199 = vector.extract_strided_slice %180 {offsets = [0, 256], sizes = [8, 128], strides = [1, 1]} : vector<8x384xf32> to vector<8x128xf32>
    %200 = vector.extract_strided_slice %182 {offsets = [0, 256], sizes = [8, 128], strides = [1, 1]} : vector<8x384xf32> to vector<8x128xf32>
    %201 = arith.mulf %190, %200 : vector<8x128xf32>
    %202 = arith.addf %199, %201 : vector<8x128xf32>
    %203 = math.tanh %202 : vector<8x128xf32>
    %204 = arith.subf %173, %203 : vector<8x128xf32>
    %205 = arith.mulf %198, %204 : vector<8x128xf32>
    %206 = arith.addf %203, %205 : vector<8x128xf32>
    %207 = arith.index_cast %c5_i32 : i32 to index
    %c0_65 = arith.constant 0 : index
    %c0_66 = arith.constant 0 : index
    %208 = vector.load %arg12[%207, %c0_65, %c0_66] : memref<8x8x128xf32, #tpu.memory_space<vmem>>, vector<1x8x128xf32>
    %209 = vector.shape_cast %208 : vector<1x8x128xf32> to vector<8x128xf32>
    %210 = vector.shape_cast %206 : vector<8x128xf32> to vector<1x8x128xf32>
    tpu.vector_store %arg12[%207, %c0_65, %c0_66], %210 {strides = array<i32>} : memref<8x8x128xf32, #tpu.memory_space<vmem>>, vector<1x8x128xf32>,
    %c6_i32 = arith.constant 6 : i32
    %211 = arith.index_cast %c6_i32 : i32 to index
    %c0_67 = arith.constant 0 : index
    %c0_68 = arith.constant 0 : index
    %212 = vector.load %arg11[%211, %c0_67, %c0_68] : memref<8x8x384xf32, #tpu.memory_space<vmem>>, vector<1x8x384xf32>
    %213 = vector.shape_cast %212 : vector<1x8x384xf32> to vector<8x384xf32>
    %c0_69 = arith.constant 0 : index
    %c0_70 = arith.constant 0 : index
    %214 = vector.load %arg6[%c0_69, %c0_70] : memref<128x384xf32, #tpu.memory_space<vmem>>, vector<128x384xf32>
    %cst_71 = arith.constant dense<0.000000e+00> : vector<8x384xf32>
    %215 = tpu.matmul %206, %214, %cst_71 {dimension_numbers = #tpu.dot_dimension_numbers<[1], [0], [0], [1], [0, 0, 1, 1], [], []>} : vector<8x128xf32>, vector<128x384xf32>, vector<8x384xf32> -> vector<8x384xf32>
    %216 = vector.extract_strided_slice %213 {offsets = [0, 0], sizes = [8, 128], strides = [1, 1]} : vector<8x384xf32> to vector<8x128xf32>
    %217 = vector.extract_strided_slice %215 {offsets = [0, 0], sizes = [8, 128], strides = [1, 1]} : vector<8x384xf32> to vector<8x128xf32>
    %218 = arith.addf %216, %217 : vector<8x128xf32>
    %219 = arith.negf %218 : vector<8x128xf32>
    %220 = math.exp %219 : vector<8x128xf32>
    %cst_72 = arith.constant 1.000000e+00 : f32
    %221 = vector.broadcast %cst_72 : f32 to vector<8x128xf32>
    %222 = arith.addf %221, %220 : vector<8x128xf32>
    %223 = arith.divf %221, %222 : vector<8x128xf32>
    %224 = vector.extract_strided_slice %213 {offsets = [0, 128], sizes = [8, 128], strides = [1, 1]} : vector<8x384xf32> to vector<8x128xf32>
    %225 = vector.extract_strided_slice %215 {offsets = [0, 128], sizes = [8, 128], strides = [1, 1]} : vector<8x384xf32> to vector<8x128xf32>
    %226 = arith.addf %224, %225 : vector<8x128xf32>
    %227 = arith.negf %226 : vector<8x128xf32>
    %228 = math.exp %227 : vector<8x128xf32>
    %cst_73 = arith.constant 1.000000e+00 : f32
    %229 = vector.broadcast %cst_73 : f32 to vector<8x128xf32>
    %230 = arith.addf %229, %228 : vector<8x128xf32>
    %231 = arith.divf %229, %230 : vector<8x128xf32>
    %232 = vector.extract_strided_slice %213 {offsets = [0, 256], sizes = [8, 128], strides = [1, 1]} : vector<8x384xf32> to vector<8x128xf32>
    %233 = vector.extract_strided_slice %215 {offsets = [0, 256], sizes = [8, 128], strides = [1, 1]} : vector<8x384xf32> to vector<8x128xf32>
    %234 = arith.mulf %223, %233 : vector<8x128xf32>
    %235 = arith.addf %232, %234 : vector<8x128xf32>
    %236 = math.tanh %235 : vector<8x128xf32>
    %237 = arith.subf %206, %236 : vector<8x128xf32>
    %238 = arith.mulf %231, %237 : vector<8x128xf32>
    %239 = arith.addf %236, %238 : vector<8x128xf32>
    %240 = arith.index_cast %c6_i32 : i32 to index
    %c0_74 = arith.constant 0 : index
    %c0_75 = arith.constant 0 : index
    %241 = vector.load %arg12[%240, %c0_74, %c0_75] : memref<8x8x128xf32, #tpu.memory_space<vmem>>, vector<1x8x128xf32>
    %242 = vector.shape_cast %241 : vector<1x8x128xf32> to vector<8x128xf32>
    %243 = vector.shape_cast %239 : vector<8x128xf32> to vector<1x8x128xf32>
    tpu.vector_store %arg12[%240, %c0_74, %c0_75], %243 {strides = array<i32>} : memref<8x8x128xf32, #tpu.memory_space<vmem>>, vector<1x8x128xf32>,
    %c7_i32 = arith.constant 7 : i32
    %244 = arith.index_cast %c7_i32 : i32 to index
    %c0_76 = arith.constant 0 : index
    %c0_77 = arith.constant 0 : index
    %245 = vector.load %arg11[%244, %c0_76, %c0_77] : memref<8x8x384xf32, #tpu.memory_space<vmem>>, vector<1x8x384xf32>
    %246 = vector.shape_cast %245 : vector<1x8x384xf32> to vector<8x384xf32>
    %c0_78 = arith.constant 0 : index
    %c0_79 = arith.constant 0 : index
    %247 = vector.load %arg6[%c0_78, %c0_79] : memref<128x384xf32, #tpu.memory_space<vmem>>, vector<128x384xf32>
    %cst_80 = arith.constant dense<0.000000e+00> : vector<8x384xf32>
    %248 = tpu.matmul %239, %247, %cst_80 {dimension_numbers = #tpu.dot_dimension_numbers<[1], [0], [0], [1], [0, 0, 1, 1], [], []>} : vector<8x128xf32>, vector<128x384xf32>, vector<8x384xf32> -> vector<8x384xf32>
    %249 = vector.extract_strided_slice %246 {offsets = [0, 0], sizes = [8, 128], strides = [1, 1]} : vector<8x384xf32> to vector<8x128xf32>
    %250 = vector.extract_strided_slice %248 {offsets = [0, 0], sizes = [8, 128], strides = [1, 1]} : vector<8x384xf32> to vector<8x128xf32>
    %251 = arith.addf %249, %250 : vector<8x128xf32>
    %252 = arith.negf %251 : vector<8x128xf32>
    %253 = math.exp %252 : vector<8x128xf32>
    %cst_81 = arith.constant 1.000000e+00 : f32
    %254 = vector.broadcast %cst_81 : f32 to vector<8x128xf32>
    %255 = arith.addf %254, %253 : vector<8x128xf32>
    %256 = arith.divf %254, %255 : vector<8x128xf32>
    %257 = vector.extract_strided_slice %246 {offsets = [0, 128], sizes = [8, 128], strides = [1, 1]} : vector<8x384xf32> to vector<8x128xf32>
    %258 = vector.extract_strided_slice %248 {offsets = [0, 128], sizes = [8, 128], strides = [1, 1]} : vector<8x384xf32> to vector<8x128xf32>
    %259 = arith.addf %257, %258 : vector<8x128xf32>
    %260 = arith.negf %259 : vector<8x128xf32>
    %261 = math.exp %260 : vector<8x128xf32>
    %cst_82 = arith.constant 1.000000e+00 : f32
    %262 = vector.broadcast %cst_82 : f32 to vector<8x128xf32>
    %263 = arith.addf %262, %261 : vector<8x128xf32>
    %264 = arith.divf %262, %263 : vector<8x128xf32>
    %265 = vector.extract_strided_slice %246 {offsets = [0, 256], sizes = [8, 128], strides = [1, 1]} : vector<8x384xf32> to vector<8x128xf32>
    %266 = vector.extract_strided_slice %248 {offsets = [0, 256], sizes = [8, 128], strides = [1, 1]} : vector<8x384xf32> to vector<8x128xf32>
    %267 = arith.mulf %256, %266 : vector<8x128xf32>
    %268 = arith.addf %265, %267 : vector<8x128xf32>
    %269 = math.tanh %268 : vector<8x128xf32>
    %270 = arith.subf %239, %269 : vector<8x128xf32>
    %271 = arith.mulf %264, %270 : vector<8x128xf32>
    %272 = arith.addf %269, %271 : vector<8x128xf32>
    %273 = arith.index_cast %c7_i32 : i32 to index
    %c0_83 = arith.constant 0 : index
    %c0_84 = arith.constant 0 : index
    %274 = vector.load %arg12[%273, %c0_83, %c0_84] : memref<8x8x128xf32, #tpu.memory_space<vmem>>, vector<1x8x128xf32>
    %275 = vector.shape_cast %274 : vector<1x8x128xf32> to vector<8x128xf32>
    %276 = vector.shape_cast %272 : vector<8x128xf32> to vector<1x8x128xf32>
    tpu.vector_store %arg12[%273, %c0_83, %c0_84], %276 {strides = array<i32>} : memref<8x8x128xf32, #tpu.memory_space<vmem>>, vector<1x8x128xf32>,
    %c8_i32 = arith.constant 8 : i32
    %c0_85 = arith.constant 0 : index
    %c0_86 = arith.constant 0 : index
    %277 = vector.load %arg10[%c0_85, %c0_86] : memref<8x128xf32, #tpu.memory_space<vmem>>, vector<8x128xf32>
    tpu.vector_store %arg10[%c0_85, %c0_86], %272 {strides = array<i32>} : memref<8x128xf32, #tpu.memory_space<vmem>>, vector<8x128xf32>,
    %c0_87 = arith.constant 0 : index
    %c0_88 = arith.constant 0 : index
    %c0_89 = arith.constant 0 : index
    %278 = vector.load %arg12[%c0_87, %c0_88, %c0_89] : memref<8x8x128xf32, #tpu.memory_space<vmem>>, vector<8x8x128xf32>
    %279 = vector.shape_cast %278 : vector<8x8x128xf32> to vector<64x128xf32>
    %c0_90 = arith.constant 0 : index
    %c0_91 = arith.constant 0 : index
    %280 = vector.load %arg7[%c0_90, %c0_91] : memref<128x128xf32, #tpu.memory_space<vmem>>, vector<128x128xf32>
    %cst_92 = arith.constant dense<0.000000e+00> : vector<64x128xf32>
    %281 = tpu.matmul %279, %280, %cst_92 {dimension_numbers = #tpu.dot_dimension_numbers<[1], [0], [0], [1], [0, 0, 1, 1], [], []>} : vector<64x128xf32>, vector<128x128xf32>, vector<64x128xf32> -> vector<64x128xf32>
    %c0_93 = arith.constant 0 : index
    %c0_94 = arith.constant 0 : index
    %282 = vector.load %arg8[%c0_93, %c0_94] : memref<1x128xf32, #tpu.memory_space<vmem>>, vector<1x128xf32>
    %283 = vector.broadcast %282 : vector<1x128xf32> to vector<64x128xf32>
    %284 = arith.addf %281, %283 : vector<64x128xf32>
    %285 = math.tanh %284 : vector<64x128xf32>
    %286 = vector.shape_cast %285 : vector<64x128xf32> to vector<8x8x128xf32>
    %c0_95 = arith.constant 0 : index
    %c0_96 = arith.constant 0 : index
    %c0_97 = arith.constant 0 : index
    %287 = vector.load %arg9[%c0_95, %c0_96, %c0_97] : memref<8x8x128xf32, #tpu.memory_space<vmem>>, vector<8x8x128xf32>
    tpu.vector_store %arg9[%c0_95, %c0_96, %c0_97], %286 {strides = array<i32>} : memref<8x8x128xf32, #tpu.memory_space<vmem>>, vector<8x8x128xf32>,
    return
  }
  func.func @transform_0(%arg0: i32, %arg1: i32) -> (i32, i32) {
    %c0_i32 = arith.constant 0 : i32
    %c0_i32_0 = arith.constant 0 : i32
    return %arg0, %c0_i32 : i32, i32
  }
  func.func @transform_1(%arg0: i32, %arg1: i32) -> (i32, i32, i32) {
    %c0_i32 = arith.constant 0 : i32
    %c0_i32_0 = arith.constant 0 : i32
    return %arg1, %arg0, %c0_i32 : i32, i32, i32
  }
  func.func @transform_2(%arg0: i32, %arg1: i32) -> (i32, i32) {
    %c0_i32 = arith.constant 0 : i32
    %c0_i32_0 = arith.constant 0 : i32
    %c0_i32_1 = arith.constant 0 : i32
    return %c0_i32, %c0_i32_0 : i32, i32
  }
  func.func @transform_3(%arg0: i32, %arg1: i32) -> (i32, i32) {
    %c0_i32 = arith.constant 0 : i32
    %c0_i32_0 = arith.constant 0 : i32
    %c0_i32_1 = arith.constant 0 : i32
    return %c0_i32, %c0_i32_0 : i32, i32
  }
  func.func @transform_4(%arg0: i32, %arg1: i32) -> (i32, i32) {
    %c0_i32 = arith.constant 0 : i32
    %c0_i32_0 = arith.constant 0 : i32
    %c0_i32_1 = arith.constant 0 : i32
    return %c0_i32, %c0_i32_0 : i32, i32
  }
  func.func @transform_5(%arg0: i32, %arg1: i32) -> (i32, i32) {
    %c0_i32 = arith.constant 0 : i32
    %c0_i32_0 = arith.constant 0 : i32
    %c0_i32_1 = arith.constant 0 : i32
    return %c0_i32, %c0_i32_0 : i32, i32
  }
  func.func @transform_6(%arg0: i32, %arg1: i32) -> (i32, i32) {
    %c0_i32 = arith.constant 0 : i32
    %c0_i32_0 = arith.constant 0 : i32
    %c0_i32_1 = arith.constant 0 : i32
    return %c0_i32, %c0_i32_0 : i32, i32
  }
  func.func @transform_7(%arg0: i32, %arg1: i32) -> (i32, i32, i32) {
    %c0_i32 = arith.constant 0 : i32
    %c0_i32_0 = arith.constant 0 : i32
    return %arg1, %arg0, %c0_i32 : i32, i32, i32
  }
  func.func @transform_8(%arg0: i32, %arg1: i32) -> (i32, i32) {
    %c0_i32 = arith.constant 0 : i32
    %c0_i32_0 = arith.constant 0 : i32
    return %arg0, %c0_i32 : i32, i32
  }
}

</mosaic_0001>

<llo_original>
// kernel: tpu_custom_call.1
$region0: #{tpu_custom_call.1}
  #allocation0 [shape = 'u32[]', space=smem, size = 0x4, offset = 0x4, fixed_abs, tag = 'smem constant byte address 0x4 - core index']
  #allocation1 [shape = 'u32[72,128]{1,0:T(1,128)}', space=vmem, size = 0x9000, scoped, tag = 'internal scratch']
  #allocation2 [shape = 'f32[8,8,384]{2,1,0:T(8,128)}', space=vmem, size = 0x18000, scoped, tag = 'scratch operand']
  #allocation3 [shape = 'f32[8,8,128]{2,1,0:T(8,128)}', space=vmem, size = 0x8000, scoped, tag = 'scratch operand']
  %s0 = inlined_call_operand.hbm [shape: f32[8,128], index: 0, kind: input, shape index: {}]
  %s1 = inlined_call_operand.hbm [shape: f32[8,8,48], index: 1, kind: input, shape index: {}]
  %s2 = inlined_call_operand.hbm [shape: f32[48,384], index: 2, kind: input, shape index: {}]
  %s3 = inlined_call_operand.hbm [shape: f32[1,384], index: 3, kind: input, shape index: {}]
  %s4 = inlined_call_operand.hbm [shape: f32[128,384], index: 4, kind: input, shape index: {}]
  %s5 = inlined_call_operand.hbm [shape: f32[128,128], index: 5, kind: input, shape index: {}]
  %s6 = inlined_call_operand.vmem [shape: f32[1,128], index: 6, kind: input, shape index: {}]
  %s7 = inlined_call_operand.hbm [shape: f32[8,8,128], index: 7, kind: output, shape index: {0}]
  %s8 = inlined_call_operand.hbm [shape: f32[8,128], index: 8, kind: output, shape index: {1}]
  %9 = xla_tuple %s7, %s8
  %s10 = sld [smem:[#allocation0]]
  $region74: #{tpu_custom_call.1} parent=0
    _
  %s12 = ssub.s32 1, %s10
  %s13 = scalar_select 0, %s12, %s10
  $region1: #{tpu_custom_call.1} parent=0
    #allocation4 [shape = 'u8[4096]{0}', space=vmem, size = 0x1000, scoped, tag = 'input window, operand 0, single buffered']
    #allocation5 [shape = 's32[1]{0}', space=sflag, size = 0x4, scoped, tag = 'scoped memory for tpu_custom_call.1']
    #allocation6 [shape = 's32[1]{0}', space=sflag, size = 0x4, scoped, tag = 'scoped memory for tpu_custom_call.1']
    #allocation7 [shape = 'u8[32768]{0}', space=vmem, size = 0x8000, scoped, tag = 'input window, operand 1, single buffered']
    #allocation8 [shape = 's32[1]{0}', space=sflag, size = 0x4, scoped, tag = 'scoped memory for tpu_custom_call.1']
    #allocation9 [shape = 'u8[73728]{0}', space=vmem, size = 0x12000, scoped, tag = 'input window, operand 2, single buffered']
    #allocation10 [shape = 'u8[1536]{0}', space=vmem, size = 0x800, scoped, tag = 'input window, operand 3, single buffered']
    #allocation11 [shape = 's32[1]{0}', space=sflag, size = 0x4, scoped, tag = 'scoped memory for tpu_custom_call.1']
    #allocation12 [shape = 'u8[196608]{0}', space=vmem, size = 0x30000, scoped, tag = 'input window, operand 4, single buffered']
    #allocation13 [shape = 'u8[65536]{0}', space=vmem, size = 0x10000, scoped, tag = 'input window, operand 5, single buffered']
    #allocation14 [shape = 's32[1]{0}', space=sflag, size = 0x4, scoped, tag = 'scoped memory for tpu_custom_call.1']
    #allocation15 [shape = 'u8[32768]{0}', space=vmem, size = 0x8000, scoped, tag = 'output window, operand 0, single buffered']
    #allocation16 [shape = 'u8[4096]{0}', space=vmem, size = 0x1000, scoped, tag = 'output window, operand 1, single buffered']
    #allocation17 [shape = 's32[1]{0}', space=sflag, size = 0x4, scoped, tag = 'scoped memory for tpu_custom_call.1']
    %14 = vsyncpa [#allocation5], 0
    %15 = vsyncpa [#allocation8], 0
    %16 = vsyncpa [#allocation11], 0
    %17 = vsyncpa [#allocation14], 0
    %18 = vsyncpa [#allocation6], 0
    %19 = vsyncpa [#allocation17], 0
    // Predicated region
    $region2: #{tpu_custom_call.1} parent=1 // pred_check
      _
    $region3: #{tpu_custom_call.1} parent=1 // pred_check_branch
      %21 = sbr.rel (0) target = $region5
    $region4: #{tpu_custom_call.1} parent=1 // pred_region
      %23 = vsyncadd [#allocation5], 0
      %s25 = sshll.u32 %s0, 4
      %s26 = int_to_ptr.hbm [resolvable:$true] %s25
      %s27 = sshll.u32 [#allocation4], 4
      %s28 = int_to_ptr.vmem [resolvable:$true] %s27
      %30 = dma.hbm_to_vmem [thread:$0]  %s26, 128, %s28, [#allocation5]
    $region5: #{tpu_custom_call.1} parent=1 // pred_fallthru
      _
    // Predicated region
    $region6: #{tpu_custom_call.1} parent=1 // pred_check
      _
    $region7: #{tpu_custom_call.1} parent=1 // pred_check_branch
      %32 = sbr.rel (0) target = $region9
    $region8: #{tpu_custom_call.1} parent=1 // pred_region
      %34 = vsyncadd [#allocation8], 0
      %s35 = sshll.u32 %s1, 4
      %s36 = int_to_ptr.hbm [resolvable:$true] %s35
      %s37 = sshll.u32 [#allocation7], 4
      %s38 = int_to_ptr.vmem [resolvable:$true] %s37
      %43 = dma.hbm_to_vmem [thread:$0]  %s36, 1024, %s38, [#allocation8], 128, 128, 8
    $region9: #{tpu_custom_call.1} parent=1 // pred_fallthru
      _
    // Predicated region
    $region10: #{tpu_custom_call.1} parent=1 // pred_check
      _
    $region11: #{tpu_custom_call.1} parent=1 // pred_check_branch
      %45 = sbr.rel (0) target = $region13
    $region12: #{tpu_custom_call.1} parent=1 // pred_region
      %47 = vsyncadd [#allocation8], 0
      %s48 = sshll.u32 %s2, 4
      %s49 = int_to_ptr.hbm [resolvable:$true] %s48
      %s50 = sshll.u32 [#allocation9], 4
      %s51 = int_to_ptr.vmem [resolvable:$true] %s50
      %56 = dma.hbm_to_vmem [thread:$0]  %s49, 2304, %s51, [#allocation8], 384, 384, 24
    $region13: #{tpu_custom_call.1} parent=1 // pred_fallthru
      _
    // Predicated region
    $region14: #{tpu_custom_call.1} parent=1 // pred_check
      _
    $region15: #{tpu_custom_call.1} parent=1 // pred_check_branch
      %58 = sbr.rel (0) target = $region17
    $region16: #{tpu_custom_call.1} parent=1 // pred_region
      %60 = vsyncadd [#allocation11], 0
      %s62 = sshll.u32 %s3, 4
      %s63 = int_to_ptr.hbm [resolvable:$true] %s62
      %s64 = sshll.u32 [#allocation10], 4
      %s65 = int_to_ptr.vmem [resolvable:$true] %s64
      %67 = dma.hbm_to_vmem [thread:$0]  %s63, 48, %s65, [#allocation11]
    $region17: #{tpu_custom_call.1} parent=1 // pred_fallthru
      _
    // Predicated region
    $region18: #{tpu_custom_call.1} parent=1 // pred_check
      _
    $region19: #{tpu_custom_call.1} parent=1 // pred_check_branch
      %69 = sbr.rel (0) target = $region21
    $region20: #{tpu_custom_call.1} parent=1 // pred_region
      %71 = vsyncadd [#allocation11], 0
      %s72 = sshll.u32 %s4, 4
      %s73 = int_to_ptr.hbm [resolvable:$true] %s72
      %s74 = sshll.u32 [#allocation12], 4
      %s75 = int_to_ptr.vmem [resolvable:$true] %s74
      %80 = dma.hbm_to_vmem [thread:$0]  %s73, 6144, %s75, [#allocation11], 384, 384, 24
    $region21: #{tpu_custom_call.1} parent=1 // pred_fallthru
      _
    // Predicated region
    $region22: #{tpu_custom_call.1} parent=1 // pred_check
      _
    $region23: #{tpu_custom_call.1} parent=1 // pred_check_branch
      %82 = sbr.rel (0) target = $region25
    $region24: #{tpu_custom_call.1} parent=1 // pred_region
      %84 = vsyncadd [#allocation14], 0
      %s85 = sshll.u32 %s5, 4
      %s86 = int_to_ptr.hbm [resolvable:$true] %s85
      %s87 = sshll.u32 [#allocation13], 4
      %s88 = int_to_ptr.vmem [resolvable:$true] %s87
      %93 = dma.hbm_to_vmem [thread:$0]  %s86, 2048, %s88, [#allocation14], 128, 128, 8
    $region25: #{tpu_custom_call.1} parent=1 // pred_fallthru
      _
    // Predicated region
    $region26: #{tpu_custom_call.1} parent=1 // pred_check
      _
    $region27: #{tpu_custom_call.1} parent=1 // pred_check_branch
      %95 = sbr.rel (0) target = $region29
    $region28: #{tpu_custom_call.1} parent=1 // pred_region
      _
    $region29: #{tpu_custom_call.1} parent=1 // pred_fallthru
      _
    // Predicated region
    $region30: #{tpu_custom_call.1} parent=1 // pred_check
      _
    $region31: #{tpu_custom_call.1} parent=1 // pred_check_branch
      %97 = sbr.rel (0) target = $region33
    $region32: #{tpu_custom_call.1} parent=1 // pred_region
      %99 = dma.done [#allocation5], 128
    $region33: #{tpu_custom_call.1} parent=1 // pred_fallthru
      _
    // Predicated region
    $region34: #{tpu_custom_call.1} parent=1 // pred_check
      _
    $region35: #{tpu_custom_call.1} parent=1 // pred_check_branch
      %101 = sbr.rel (0) target = $region37
    $region36: #{tpu_custom_call.1} parent=1 // pred_region
      %103 = dma.done [#allocation8], 1024
    $region37: #{tpu_custom_call.1} parent=1 // pred_fallthru
      _
    // Predicated region
    $region38: #{tpu_custom_call.1} parent=1 // pred_check
      _
    $region39: #{tpu_custom_call.1} parent=1 // pred_check_branch
      %105 = sbr.rel (0) target = $region41
    $region40: #{tpu_custom_call.1} parent=1 // pred_region
      %107 = dma.done [#allocation8], 2304
    $region41: #{tpu_custom_call.1} parent=1 // pred_fallthru
      _
    // Predicated region
    $region42: #{tpu_custom_call.1} parent=1 // pred_check
      _
    $region43: #{tpu_custom_call.1} parent=1 // pred_check_branch
      %109 = sbr.rel (0) target = $region45
    $region44: #{tpu_custom_call.1} parent=1 // pred_region
      %111 = dma.done [#allocation11], 48
    $region45: #{tpu_custom_call.1} parent=1 // pred_fallthru
      _
    // Predicated region
    $region46: #{tpu_custom_call.1} parent=1 // pred_check
      _
    $region47: #{tpu_custom_call.1} parent=1 // pred_check_branch
      %113 = sbr.rel (0) target = $region49
    $region48: #{tpu_custom_call.1} parent=1 // pred_region
      %115 = dma.done [#allocation11], 6144
    $region49: #{tpu_custom_call.1} parent=1 // pred_fallthru
      _
    // Predicated region
    $region50: #{tpu_custom_call.1} parent=1 // pred_check
      _
    $region51: #{tpu_custom_call.1} parent=1 // pred_check_branch
      %117 = sbr.rel (0) target = $region53
    $region52: #{tpu_custom_call.1} parent=1 // pred_region
      %119 = dma.done [#allocation14], 2048
    $region53: #{tpu_custom_call.1} parent=1 // pred_fallthru
      _
    %p120 = scmp.eq.s32.totalorder 0, 0
    // Predicated region
    $region54: #{tpu_custom_call.1} parent=1 // pred_check
      %p121 = pneg %p120
    $region55: #{tpu_custom_call.1} parent=1 // pred_check_branch
      %123 = sbr.rel (%p121) target = $region57
    $region56: #{tpu_custom_call.1} parent=1 // pred_region
      %v124 = vld [vmem:[#allocation4] sm:$0xff]
      %125 = vst [vmem:[#allocation16] sm:$0xff] %v124
    $region57: #{tpu_custom_call.1} parent=1 // pred_fallthru
      _
    %v126 = vld [vmem:[#allocation7] sm:$0xff]
    %v127 = vld [vmem:[#allocation7 + $0x8] sm:$0xff]
    %v128 = vld [vmem:[#allocation7 + $0x10] sm:$0xff]
    %v129 = vld [vmem:[#allocation7 + $0x18] sm:$0xff]
    %v130 = vld [vmem:[#allocation7 + $0x20] sm:$0xff]
    %v131 = vld [vmem:[#allocation7 + $0x28] sm:$0xff]
    %v132 = vld [vmem:[#allocation7 + $0x30] sm:$0xff]
    %v133 = vld [vmem:[#allocation7 + $0x38] sm:$0xff]
    %v134 = vld [vmem:[#allocation9] sm:$0xff]
    %v135 = vld [vmem:[#allocation9 + $0x8] sm:$0xff]
    %v136 = vld [vmem:[#allocation9 + $0x10] sm:$0xff]
    %v137 = vld [vmem:[#allocation9 + $0x18] sm:$0xff]
    %v138 = vld [vmem:[#allocation9 + $0x20] sm:$0xff]
    %v139 = vld [vmem:[#allocation9 + $0x28] sm:$0xff]
    %v140 = vld [vmem:[#allocation9 + $0x30] sm:$0xff]
    %v141 = vld [vmem:[#allocation9 + $0x38] sm:$0xff]
    %v142 = vld [vmem:[#allocation9 + $0x40] sm:$0xff]
    %v143 = vld [vmem:[#allocation9 + $0x48] sm:$0xff]
    %v144 = vld [vmem:[#allocation9 + $0x50] sm:$0xff]
    %v145 = vld [vmem:[#allocation9 + $0x58] sm:$0xff]
    %v146 = vld [vmem:[#allocation9 + $0x60] sm:$0xff]
    %v147 = vld [vmem:[#allocation9 + $0x68] sm:$0xff]
    %v148 = vld [vmem:[#allocation9 + $0x70] sm:$0xff]
    %v149 = vld [vmem:[#allocation9 + $0x78] sm:$0xff]
    %v150 = vld [vmem:[#allocation9 + $0x80] sm:$0xff]
    %v151 = vld [vmem:[#allocation9 + $0x88] sm:$0xff]
    %v152 = vld [vmem:[#allocation10] sm:$0x7]
    %v154 = vperm.slane %v152, 0
    %v155 = vperm.slane %v152, 1
    %v156 = vperm.slane %v152, 2
    %vm160 = vcmask 392192
    %v162 = vsel %vm160, %v126, 0
    %v165 = vsel %vm160, %v127, 0
    %v168 = vsel %vm160, %v128, 0
    %v171 = vsel %vm160, %v129, 0
    %v174 = vsel %vm160, %v130, 0
    %v177 = vsel %vm160, %v131, 0
    %v180 = vsel %vm160, %v132, 0
    %v183 = vsel %vm160, %v133, 0
    %185 = vmatpush.msra.mxu0 0.0
    %186 = vmatpush.msra.mxu0 0.0
    %187 = vmatpush.msra.mxu0 0.0
    %188 = vmatpush.msra.mxu0 0.0
    %189 = vmatpush.msra.mxu0 0.0
    %190 = vmatpush.msra.mxu0 0.0
    %191 = vmatpush.msra.mxu0 0.0
    %192 = vmatpush.msra.mxu0 0.0
    %193 = vmatpush.msra.mxu0 0.0
    %194 = vmatpush.msra.mxu0 0.0
    %195 = vmatpush.msra.mxu0 %v149
    %196 = vmatpush.msra.mxu0 %v146
    %197 = vmatpush.msra.mxu0 %v143
    %198 = vmatpush.msra.mxu0 %v140
    %199 = vmatpush.msra.mxu0 %v137
    %200 = vmatpush.msra.mxu0 %v134
    %201 = vmatmul.f32.gmra.mxu0 %v162
    %v202 = vpop.f32.mrf.mxu0
    %v203 = vadd.f32 %v154, %v202
    %204 = vmatmul.f32.gmra.mxu0 %v165
    %v205 = vpop.f32.mrf.mxu0
    %v206 = vadd.f32 %v154, %v205
    %207 = vmatmul.f32.gmra.mxu0 %v168
    %v208 = vpop.f32.mrf.mxu0
    %v209 = vadd.f32 %v154, %v208
    %210 = vmatmul.f32.gmra.mxu0 %v171
    %v211 = vpop.f32.mrf.mxu0
    %v212 = vadd.f32 %v154, %v211
    %213 = vmatmul.f32.gmra.mxu0 %v174
    %v214 = vpop.f32.mrf.mxu0
    %v215 = vadd.f32 %v154, %v214
    %216 = vmatmul.f32.gmra.mxu0 %v177
    %v217 = vpop.f32.mrf.mxu0
    %v218 = vadd.f32 %v154, %v217
    %219 = vmatmul.f32.gmra.mxu0 %v180
    %v220 = vpop.f32.mrf.mxu0
    %v221 = vadd.f32 %v154, %v220
    %222 = vmatmul.f32.gmra.mxu0 %v183
    %v223 = vpop.f32.mrf.mxu0
    %v224 = vadd.f32 %v154, %v223
    %225 = vdwg.mxu0
    %226 = vmatpush.msra.mxu0 0.0
    %227 = vmatpush.msra.mxu0 0.0
    %228 = vmatpush.msra.mxu0 0.0
    %229 = vmatpush.msra.mxu0 0.0
    %230 = vmatpush.msra.mxu0 0.0
    %231 = vmatpush.msra.mxu0 0.0
    %232 = vmatpush.msra.mxu0 0.0
    %233 = vmatpush.msra.mxu0 0.0
    %234 = vmatpush.msra.mxu0 0.0
    %235 = vmatpush.msra.mxu0 0.0
    %236 = vmatpush.msra.mxu0 %v150
    %237 = vmatpush.msra.mxu0 %v147
    %238 = vmatpush.msra.mxu0 %v144
    %239 = vmatpush.msra.mxu0 %v141
    %240 = vmatpush.msra.mxu0 %v138
    %241 = vmatpush.msra.mxu0 %v135
    %242 = vmatmul.f32.gmra.mxu0 %v162
    %v243 = vpop.f32.mrf.mxu0
    %v244 = vadd.f32 %v155, %v243
    %245 = vmatmul.f32.gmra.mxu0 %v165
    %v246 = vpop.f32.mrf.mxu0
    %v247 = vadd.f32 %v155, %v246
    %248 = vmatmul.f32.gmra.mxu0 %v168
    %v249 = vpop.f32.mrf.mxu0
    %v250 = vadd.f32 %v155, %v249
    %251 = vmatmul.f32.gmra.mxu0 %v171
    %v252 = vpop.f32.mrf.mxu0
    %v253 = vadd.f32 %v155, %v252
    %254 = vmatmul.f32.gmra.mxu0 %v174
    %v255 = vpop.f32.mrf.mxu0
    %v256 = vadd.f32 %v155, %v255
    %257 = vmatmul.f32.gmra.mxu0 %v177
    %v258 = vpop.f32.mrf.mxu0
    %v259 = vadd.f32 %v155, %v258
    %260 = vmatmul.f32.gmra.mxu0 %v180
    %v261 = vpop.f32.mrf.mxu0
    %v262 = vadd.f32 %v155, %v261
    %263 = vmatmul.f32.gmra.mxu0 %v183
    %v264 = vpop.f32.mrf.mxu0
    %v265 = vadd.f32 %v155, %v264
    %266 = vdwg.mxu0
    %267 = vmatpush.msra.mxu0 0.0
    %268 = vmatpush.msra.mxu0 0.0
    %269 = vmatpush.msra.mxu0 0.0
    %270 = vmatpush.msra.mxu0 0.0
    %271 = vmatpush.msra.mxu0 0.0
    %272 = vmatpush.msra.mxu0 0.0
    %273 = vmatpush.msra.mxu0 0.0
    %274 = vmatpush.msra.mxu0 0.0
    %275 = vmatpush.msra.mxu0 0.0
    %276 = vmatpush.msra.mxu0 0.0
    %277 = vmatpush.msra.mxu0 %v151
    %278 = vmatpush.msra.mxu0 %v148
    %279 = vmatpush.msra.mxu0 %v145
    %280 = vmatpush.msra.mxu0 %v142
    %281 = vmatpush.msra.mxu0 %v139
    %282 = vmatpush.msra.mxu0 %v136
    %283 = vmatmul.f32.gmra.mxu0 %v162
    %v284 = vpop.f32.mrf.mxu0
    %v285 = vadd.f32 %v156, %v284
    %286 = vmatmul.f32.gmra.mxu0 %v165
    %v287 = vpop.f32.mrf.mxu0
    %v288 = vadd.f32 %v156, %v287
    %289 = vmatmul.f32.gmra.mxu0 %v168
    %v290 = vpop.f32.mrf.mxu0
    %v291 = vadd.f32 %v156, %v290
    %292 = vmatmul.f32.gmra.mxu0 %v171
    %v293 = vpop.f32.mrf.mxu0
    %v294 = vadd.f32 %v156, %v293
    %295 = vmatmul.f32.gmra.mxu0 %v174
    %v296 = vpop.f32.mrf.mxu0
    %v297 = vadd.f32 %v156, %v296
    %298 = vmatmul.f32.gmra.mxu0 %v177
    %v299 = vpop.f32.mrf.mxu0
    %v300 = vadd.f32 %v156, %v299
    %301 = vmatmul.f32.gmra.mxu0 %v180
    %v302 = vpop.f32.mrf.mxu0
    %v303 = vadd.f32 %v156, %v302
    %304 = vmatmul.f32.gmra.mxu0 %v183
    %v305 = vpop.f32.mrf.mxu0
    %v306 = vadd.f32 %v156, %v305
    %307 = vdwg.mxu0
    %308 = vst [vmem:[#allocation2] sm:$0xff] %v203
    %309 = vst [vmem:[#allocation2 + $0x8] sm:$0xff] %v244
    %310 = vst [vmem:[#allocation2 + $0x10] sm:$0xff] %v285
    %311 = vst [vmem:[#allocation2 + $0x18] sm:$0xff] %v206
    %312 = vst [vmem:[#allocation2 + $0x20] sm:$0xff] %v247
    %313 = vst [vmem:[#allocation2 + $0x28] sm:$0xff] %v288
    %314 = vst [vmem:[#allocation2 + $0x30] sm:$0xff] %v209
    %315 = vst [vmem:[#allocation2 + $0x38] sm:$0xff] %v250
    %316 = vst [vmem:[#allocation2 + $0x40] sm:$0xff] %v291
    %317 = vst [vmem:[#allocation2 + $0x48] sm:$0xff] %v212
    %318 = vst [vmem:[#allocation2 + $0x50] sm:$0xff] %v253
    %319 = vst [vmem:[#allocation2 + $0x58] sm:$0xff] %v294
    %320 = vst [vmem:[#allocation2 + $0x60] sm:$0xff] %v215
    %321 = vst [vmem:[#allocation2 + $0x68] sm:$0xff] %v256
    %322 = vst [vmem:[#allocation2 + $0x70] sm:$0xff] %v297
    %323 = vst [vmem:[#allocation2 + $0x78] sm:$0xff] %v218
    %324 = vst [vmem:[#allocation2 + $0x80] sm:$0xff] %v259
    %325 = vst [vmem:[#allocation2 + $0x88] sm:$0xff] %v300
    %326 = vst [vmem:[#allocation2 + $0x90] sm:$0xff] %v221
    %327 = vst [vmem:[#allocation2 + $0x98] sm:$0xff] %v262
    %328 = vst [vmem:[#allocation2 + $0xa0] sm:$0xff] %v303
    %329 = vst [vmem:[#allocation2 + $0xa8] sm:$0xff] %v224
    %330 = vst [vmem:[#allocation2 + $0xb0] sm:$0xff] %v265
    %331 = vst [vmem:[#allocation2 + $0xb8] sm:$0xff] %v306
    %v332 = vld [vmem:[#allocation16] sm:$0xff]
    %v333 = vld [vmem:[#allocation2] sm:$0xff]
    %v334 = vld [vmem:[#allocation2 + $0x8] sm:$0xff]
    %v335 = vld [vmem:[#allocation2 + $0x10] sm:$0xff]
    %v336 = vld [vmem:[#allocation12] sm:$0xff]
    %v337 = vld [vmem:[#allocation12 + $0x8] sm:$0xff]
    %v338 = vld [vmem:[#allocation12 + $0x10] sm:$0xff]
    %v339 = vld [vmem:[#allocation12 + $0x18] sm:$0xff]
    %v340 = vld [vmem:[#allocation12 + $0x20] sm:$0xff]
    %v341 = vld [vmem:[#allocation12 + $0x28] sm:$0xff]
    %v342 = vld [vmem:[#allocation12 + $0x30] sm:$0xff]
    %v343 = vld [vmem:[#allocation12 + $0x38] sm:$0xff]
    %v344 = vld [vmem:[#allocation12 + $0x40] sm:$0xff]
    %v345 = vld [vmem:[#allocation12 + $0x48] sm:$0xff]
    %v346 = vld [vmem:[#allocation12 + $0x50] sm:$0xff]
    %v347 = vld [vmem:[#allocation12 + $0x58] sm:$0xff]
    %v348 = vld [vmem:[#allocation12 + $0x60] sm:$0xff]
    %v349 = vld [vmem:[#allocation12 + $0x68] sm:$0xff]
    %v350 = vld [vmem:[#allocation12 + $0x70] sm:$0xff]
    %v351 = vld [vmem:[#allocation12 + $0x78] sm:$0xff]
    %v352 = vld [vmem:[#allocation12 + $0x80] sm:$0xff]
    %v353 = vld [vmem:[#allocation12 + $0x88] sm:$0xff]
    %v354 = vld [vmem:[#allocation12 + $0x90] sm:$0xff]
    %v355 = vld [vmem:[#allocation12 + $0x98] sm:$0xff]
    %v356 = vld [vmem:[#allocation12 + $0xa0] sm:$0xff]
    %v357 = vld [vmem:[#allocation12 + $0xa8] sm:$0xff]
    %v358 = vld [vmem:[#allocation12 + $0xb0] sm:$0xff]
    %v359 = vld [vmem:[#allocation12 + $0xb8] sm:$0xff]
    %v360 = vld [vmem:[#allocation12 + $0xc0] sm:$0xff]
    %v361 = vld [vmem:[#allocation12 + $0xc8] sm:$0xff]
    %v362 = vld [vmem:[#allocation12 + $0xd0] sm:$0xff]
    %v363 = vld [vmem:[#allocation12 + $0xd8] sm:$0xff]
    %v364 = vld [vmem:[#allocation12 + $0xe0] sm:$0xff]
    %v365 = vld [vmem:[#allocation12 + $0xe8] sm:$0xff]
    %v366 = vld [vmem:[#allocation12 + $0xf0] sm:$0xff]
    %v367 = vld [vmem:[#allocation12 + $0xf8] sm:$0xff]
    %v368 = vld [vmem:[#allocation12 + $0x100] sm:$0xff]
    %v369 = vld [vmem:[#allocation12 + $0x108] sm:$0xff]
    %v370 = vld [vmem:[#allocation12 + $0x110] sm:$0xff]
    %v371 = vld [vmem:[#allocation12 + $0x118] sm:$0xff]
    %v372 = vld [vmem:[#allocation12 + $0x120] sm:$0xff]
    %v373 = vld [vmem:[#allocation12 + $0x128] sm:$0xff]
    %v374 = vld [vmem:[#allocation12 + $0x130] sm:$0xff]
    %v375 = vld [vmem:[#allocation12 + $0x138] sm:$0xff]
    %v376 = vld [vmem:[#allocation12 + $0x140] sm:$0xff]
    %v377 = vld [vmem:[#allocation12 + $0x148] sm:$0xff]
    %v378 = vld [vmem:[#allocation12 + $0x150] sm:$0xff]
    %v379 = vld [vmem:[#allocation12 + $0x158] sm:$0xff]
    %v380 = vld [vmem:[#allocation12 + $0x160] sm:$0xff]
    %v381 = vld [vmem:[#allocation12 + $0x168] sm:$0xff]
    %v382 = vld [vmem:[#allocation12 + $0x170] sm:$0xff]
    %v383 = vld [vmem:[#allocation12 + $0x178] sm:$0xff]
    %384 = vmatpush.msra.mxu0 %v381
    %385 = vmatpush.msra.mxu0 %v378
    %386 = vmatpush.msra.mxu0 %v375
    %387 = vmatpush.msra.mxu0 %v372
    %388 = vmatpush.msra.mxu0 %v369
    %389 = vmatpush.msra.mxu0 %v366
    %390 = vmatpush.msra.mxu0 %v363
    %391 = vmatpush.msra.mxu0 %v360
    %392 = vmatpush.msra.mxu0 %v357
    %393 = vmatpush.msra.mxu0 %v354
    %394 = vmatpush.msra.mxu0 %v351
    %395 = vmatpush.msra.mxu0 %v348
    %396 = vmatpush.msra.mxu0 %v345
    %397 = vmatpush.msra.mxu0 %v342
    %398 = vmatpush.msra.mxu0 %v339
    %399 = vmatpush.msra.mxu0 %v336
    %400 = vmatmul.f32.gmra.mxu0 %v332
    %v401 = vpop.f32.mrf.mxu0
    %v402 = vadd.f32 0.0, %v401
    %403 = vdwg.mxu0
    %404 = vmatpush.msra.mxu0 %v382
    %405 = vmatpush.msra.mxu0 %v379
    %406 = vmatpush.msra.mxu0 %v376
    %407 = vmatpush.msra.mxu0 %v373
    %408 = vmatpush.msra.mxu0 %v370
    %409 = vmatpush.msra.mxu0 %v367
    %410 = vmatpush.msra.mxu0 %v364
    %411 = vmatpush.msra.mxu0 %v361
    %412 = vmatpush.msra.mxu0 %v358
    %413 = vmatpush.msra.mxu0 %v355
    %414 = vmatpush.msra.mxu0 %v352
    %415 = vmatpush.msra.mxu0 %v349
    %416 = vmatpush.msra.mxu0 %v346
    %417 = vmatpush.msra.mxu0 %v343
    %418 = vmatpush.msra.mxu0 %v340
    %419 = vmatpush.msra.mxu0 %v337
    %420 = vmatmul.f32.gmra.mxu0 %v332
    %v421 = vpop.f32.mrf.mxu0
    %v422 = vadd.f32 0.0, %v421
    %423 = vdwg.mxu0
    %424 = vmatpush.msra.mxu0 %v383
    %425 = vmatpush.msra.mxu0 %v380
    %426 = vmatpush.msra.mxu0 %v377
    %427 = vmatpush.msra.mxu0 %v374
    %428 = vmatpush.msra.mxu0 %v371
    %429 = vmatpush.msra.mxu0 %v368
    %430 = vmatpush.msra.mxu0 %v365
    %431 = vmatpush.msra.mxu0 %v362
    %432 = vmatpush.msra.mxu0 %v359
    %433 = vmatpush.msra.mxu0 %v356
    %434 = vmatpush.msra.mxu0 %v353
    %435 = vmatpush.msra.mxu0 %v350
    %436 = vmatpush.msra.mxu0 %v347
    %437 = vmatpush.msra.mxu0 %v344
    %438 = vmatpush.msra.mxu0 %v341
    %439 = vmatpush.msra.mxu0 %v338
    %440 = vmatmul.f32.gmra.mxu0 %v332
    %v441 = vpop.f32.mrf.mxu0
    %v442 = vadd.f32 0.0, %v441
    %443 = vdwg.mxu0
    %v444 = vadd.f32 %v333, %v402
    %v445 = vxor.u32 %v444, 2147483648
    %v446 = vmul.f32 %v445, 1.442695
    %v447 = vpow.pop %v446
    %v448 = vadd.f32 %v447, 1.0
    %v449 = vrcp.pop %v448
    %v450 = vmul.f32 %v448, %v449
    %v451 = vsub.f32 1.0, %v450
    %v452 = vmul.f32 %v449, %v451
    %v453 = vadd.f32 %v449, %v452
    %vm454 = vweird.f32 %v448
    %vm455 = vweird.f32 %v449
    %vm456 = vmor %vm454, %vm455
    %v457 = vsel %vm456, %v449, %v453
    %v458 = vand.u32 2147483647, %v448
    %vm459 = vcmp.eq.f32.partialorder %v458, 8.507059e+37
    %v460 = vand.u32 %v448, 2147483648
    %v461 = vor.u32 1.1754944e-38, %v460
    %v462 = vsel %vm459, %v461, %v457
    %v463 = vmul.f32 1.0, %v462
    %v464 = vadd.f32 %v334, %v422
    %v465 = vxor.u32 %v464, 2147483648
    %v466 = vmul.f32 %v465, 1.442695
    %v467 = vpow.pop %v466
    %v468 = vadd.f32 %v467, 1.0
    %v469 = vrcp.pop %v468
    %v470 = vmul.f32 %v468, %v469
    %v471 = vsub.f32 1.0, %v470
    %v472 = vmul.f32 %v469, %v471
    %v473 = vadd.f32 %v469, %v472
    %vm474 = vweird.f32 %v468
    %vm475 = vweird.f32 %v469
    %vm476 = vmor %vm474, %vm475
    %v477 = vsel %vm476, %v469, %v473
    %v478 = vand.u32 2147483647, %v468
    %vm479 = vcmp.eq.f32.partialorder %v478, 8.507059e+37
    %v480 = vand.u32 %v468, 2147483648
    %v481 = vor.u32 1.1754944e-38, %v480
    %v482 = vsel %vm479, %v481, %v477
    %v483 = vmul.f32 1.0, %v482
    %v484 = vmul.f32 %v463, %v442
    %v485 = vadd.f32 %v335, %v484
    %v486 = vtanh.pop %v485
    %v487 = vsub.f32 %v332, %v486
    %v488 = vmul.f32 %v483, %v487
    %v489 = vadd.f32 %v486, %v488
    %490 = vst [vmem:[#allocation3] sm:$0xff] %v489
    %s491 = scalar_lea.vmem [#allocation2], 24
    %v492 = vld [vmem:[%s491] sm:$0xff]
    %v493 = vld [vmem:[%s491 + $0x8] sm:$0xff]
    %v494 = vld [vmem:[%s491 + $0x10] sm:$0xff]
    %v495 = vld [vmem:[#allocation12] sm:$0xff]
    %v496 = vld [vmem:[#allocation12 + $0x8] sm:$0xff]
    %v497 = vld [vmem:[#allocation12 + $0x10] sm:$0xff]
    %v498 = vld [vmem:[#allocation12 + $0x18] sm:$0xff]
    %v499 = vld [vmem:[#allocation12 + $0x20] sm:$0xff]
    %v500 = vld [vmem:[#allocation12 + $0x28] sm:$0xff]
    %v501 = vld [vmem:[#allocation12 + $0x30] sm:$0xff]
    %v502 = vld [vmem:[#allocation12 + $0x38] sm:$0xff]
    %v503 = vld [vmem:[#allocation12 + $0x40] sm:$0xff]
    %v504 = vld [vmem:[#allocation12 + $0x48] sm:$0xff]
    %v505 = vld [vmem:[#allocation12 + $0x50] sm:$0xff]
    %v506 = vld [vmem:[#allocation12 + $0x58] sm:$0xff]
    %v507 = vld [vmem:[#allocation12 + $0x60] sm:$0xff]
    %v508 = vld [vmem:[#allocation12 + $0x68] sm:$0xff]
    %v509 = vld [vmem:[#allocation12 + $0x70] sm:$0xff]
    %v510 = vld [vmem:[#allocation12 + $0x78] sm:$0xff]
    %v511 = vld [vmem:[#allocation12 + $0x80] sm:$0xff]
    %v512 = vld [vmem:[#allocation12 + $0x88] sm:$0xff]
    %v513 = vld [vmem:[#allocation12 + $0x90] sm:$0xff]
    %v514 = vld [vmem:[#allocation12 + $0x98] sm:$0xff]
    %v515 = vld [vmem:[#allocation12 + $0xa0] sm:$0xff]
    %v516 = vld [vmem:[#allocation12 + $0xa8] sm:$0xff]
    %v517 = vld [vmem:[#allocation12 + $0xb0] sm:$0xff]
    %v518 = vld [vmem:[#allocation12 + $0xb8] sm:$0xff]
    %v519 = vld [vmem:[#allocation12 + $0xc0] sm:$0xff]
    %v520 = vld [vmem:[#allocation12 + $0xc8] sm:$0xff]
    %v521 = vld [vmem:[#allocation12 + $0xd0] sm:$0xff]
    %v522 = vld [vmem:[#allocation12 + $0xd8] sm:$0xff]
    %v523 = vld [vmem:[#allocation12 + $0xe0] sm:$0xff]
    %v524 = vld [vmem:[#allocation12 + $0xe8] sm:$0xff]
    %v525 = vld [vmem:[#allocation12 + $0xf0] sm:$0xff]
    %v526 = vld [vmem:[#allocation12 + $0xf8] sm:$0xff]
    %v527 = vld [vmem:[#allocation12 + $0x100] sm:$0xff]
    %v528 = vld [vmem:[#allocation12 + $0x108] sm:$0xff]
    %v529 = vld [vmem:[#allocation12 + $0x110] sm:$0xff]
    %v530 = vld [vmem:[#allocation12 + $0x118] sm:$0xff]
    %v531 = vld [vmem:[#allocation12 + $0x120] sm:$0xff]
    %v532 = vld [vmem:[#allocation12 + $0x128] sm:$0xff]
    %v533 = vld [vmem:[#allocation12 + $0x130] sm:$0xff]
    %v534 = vld [vmem:[#allocation12 + $0x138] sm:$0xff]
    %v535 = vld [vmem:[#allocation12 + $0x140] sm:$0xff]
    %v536 = vld [vmem:[#allocation12 + $0x148] sm:$0xff]
    %v537 = vld [vmem:[#allocation12 + $0x150] sm:$0xff]
    %v538 = vld [vmem:[#allocation12 + $0x158] sm:$0xff]
    %v539 = vld [vmem:[#allocation12 + $0x160] sm:$0xff]
    %v540 = vld [vmem:[#allocation12 + $0x168] sm:$0xff]
    %v541 = vld [vmem:[#allocation12 + $0x170] sm:$0xff]
    %v542 = vld [vmem:[#allocation12 + $0x178] sm:$0xff]
    %543 = vmatpush.msra.mxu0 %v540
    %544 = vmatpush.msra.mxu0 %v537
    %545 = vmatpush.msra.mxu0 %v534
    %546 = vmatpush.msra.mxu0 %v531
    %547 = vmatpush.msra.mxu0 %v528
    %548 = vmatpush.msra.mxu0 %v525
    %549 = vmatpush.msra.mxu0 %v522
    %550 = vmatpush.msra.mxu0 %v519
    %551 = vmatpush.msra.mxu0 %v516
    %552 = vmatpush.msra.mxu0 %v513
    %553 = vmatpush.msra.mxu0 %v510
    %554 = vmatpush.msra.mxu0 %v507
    %555 = vmatpush.msra.mxu0 %v504
    %556 = vmatpush.msra.mxu0 %v501
    %557 = vmatpush.msra.mxu0 %v498
    %558 = vmatpush.msra.mxu0 %v495
    %559 = vmatmul.f32.gmra.mxu0 %v489
    %v560 = vpop.f32.mrf.mxu0
    %v561 = vadd.f32 0.0, %v560
    %562 = vdwg.mxu0
    %563 = vmatpush.msra.mxu0 %v541
    %564 = vmatpush.msra.mxu0 %v538
    %565 = vmatpush.msra.mxu0 %v535
    %566 = vmatpush.msra.mxu0 %v532
    %567 = vmatpush.msra.mxu0 %v529
    %568 = vmatpush.msra.mxu0 %v526
    %569 = vmatpush.msra.mxu0 %v523
    %570 = vmatpush.msra.mxu0 %v520
    %571 = vmatpush.msra.mxu0 %v517
    %572 = vmatpush.msra.mxu0 %v514
    %573 = vmatpush.msra.mxu0 %v511
    %574 = vmatpush.msra.mxu0 %v508
    %575 = vmatpush.msra.mxu0 %v505
    %576 = vmatpush.msra.mxu0 %v502
    %577 = vmatpush.msra.mxu0 %v499
    %578 = vmatpush.msra.mxu0 %v496
    %579 = vmatmul.f32.gmra.mxu0 %v489
    %v580 = vpop.f32.mrf.mxu0
    %v581 = vadd.f32 0.0, %v580
    %582 = vdwg.mxu0
    %583 = vmatpush.msra.mxu0 %v542
    %584 = vmatpush.msra.mxu0 %v539
    %585 = vmatpush.msra.mxu0 %v536
    %586 = vmatpush.msra.mxu0 %v533
    %587 = vmatpush.msra.mxu0 %v530
    %588 = vmatpush.msra.mxu0 %v527
    %589 = vmatpush.msra.mxu0 %v524
    %590 = vmatpush.msra.mxu0 %v521
    %591 = vmatpush.msra.mxu0 %v518
    %592 = vmatpush.msra.mxu0 %v515
    %593 = vmatpush.msra.mxu0 %v512
    %594 = vmatpush.msra.mxu0 %v509
    %595 = vmatpush.msra.mxu0 %v506
    %596 = vmatpush.msra.mxu0 %v503
    %597 = vmatpush.msra.mxu0 %v500
    %598 = vmatpush.msra.mxu0 %v497
    %599 = vmatmul.f32.gmra.mxu0 %v489
    %v600 = vpop.f32.mrf.mxu0
    %v601 = vadd.f32 0.0, %v600
    %602 = vdwg.mxu0
    %v603 = vadd.f32 %v492, %v561
    %v604 = vxor.u32 %v603, 2147483648
    %v605 = vmul.f32 %v604, 1.442695
    %v606 = vpow.pop %v605
    %v607 = vadd.f32 %v606, 1.0
    %v608 = vrcp.pop %v607
    %v609 = vmul.f32 %v607, %v608
    %v610 = vsub.f32 1.0, %v609
    %v611 = vmul.f32 %v608, %v610
    %v612 = vadd.f32 %v608, %v611
    %vm613 = vweird.f32 %v607
    %vm614 = vweird.f32 %v608
    %vm615 = vmor %vm613, %vm614
    %v616 = vsel %vm615, %v608, %v612
    %v617 = vand.u32 2147483647, %v607
    %vm618 = vcmp.eq.f32.partialorder %v617, 8.507059e+37
    %v619 = vand.u32 %v607, 2147483648
    %v620 = vor.u32 1.1754944e-38, %v619
    %v621 = vsel %vm618, %v620, %v616
    %v622 = vmul.f32 1.0, %v621
    %v623 = vadd.f32 %v493, %v581
    %v624 = vxor.u32 %v623, 2147483648
    %v625 = vmul.f32 %v624, 1.442695
    %v626 = vpow.pop %v625
    %v627 = vadd.f32 %v626, 1.0
    %v628 = vrcp.pop %v627
    %v629 = vmul.f32 %v627, %v628
    %v630 = vsub.f32 1.0, %v629
    %v631 = vmul.f32 %v628, %v630
    %v632 = vadd.f32 %v628, %v631
    %vm633 = vweird.f32 %v627
    %vm634 = vweird.f32 %v628
    %vm635 = vmor %vm633, %vm634
    %v636 = vsel %vm635, %v628, %v632
    %v637 = vand.u32 2147483647, %v627
    %vm638 = vcmp.eq.f32.partialorder %v637, 8.507059e+37
    %v639 = vand.u32 %v627, 2147483648
    %v640 = vor.u32 1.1754944e-38, %v639
    %v641 = vsel %vm638, %v640, %v636
    %v642 = vmul.f32 1.0, %v641
    %v643 = vmul.f32 %v622, %v601
    %v644 = vadd.f32 %v494, %v643
    %v645 = vtanh.pop %v644
    %v646 = vsub.f32 %v489, %v645
    %v647 = vmul.f32 %v642, %v646
    %v648 = vadd.f32 %v645, %v647
    %s649 = scalar_lea.vmem [#allocation3], 8
    %650 = vst [vmem:[%s649] sm:$0xff] %v648
    %s651 = scalar_lea.vmem [#allocation2], 48
    %v652 = vld [vmem:[%s651] sm:$0xff]
    %v653 = vld [vmem:[%s651 + $0x8] sm:$0xff]
    %v654 = vld [vmem:[%s651 + $0x10] sm:$0xff]
    %v655 = vld [vmem:[#allocation12] sm:$0xff]
    %v656 = vld [vmem:[#allocation12 + $0x8] sm:$0xff]
    %v657 = vld [vmem:[#allocation12 + $0x10] sm:$0xff]
    %v658 = vld [vmem:[#allocation12 + $0x18] sm:$0xff]
    %v659 = vld [vmem:[#allocation12 + $0x20] sm:$0xff]
    %v660 = vld [vmem:[#allocation12 + $0x28] sm:$0xff]
    %v661 = vld [vmem:[#allocation12 + $0x30] sm:$0xff]
    %v662 = vld [vmem:[#allocation12 + $0x38] sm:$0xff]
    %v663 = vld [vmem:[#allocation12 + $0x40] sm:$0xff]
    %v664 = vld [vmem:[#allocation12 + $0x48] sm:$0xff]
    %v665 = vld [vmem:[#allocation12 + $0x50] sm:$0xff]
    %v666 = vld [vmem:[#allocation12 + $0x58] sm:$0xff]
    %v667 = vld [vmem:[#allocation12 + $0x60] sm:$0xff]
    %v668 = vld [vmem:[#allocation12 + $0x68] sm:$0xff]
    %v669 = vld [vmem:[#allocation12 + $0x70] sm:$0xff]
    %v670 = vld [vmem:[#allocation12 + $0x78] sm:$0xff]
    %v671 = vld [vmem:[#allocation12 + $0x80] sm:$0xff]
    %v672 = vld [vmem:[#allocation12 + $0x88] sm:$0xff]
    %v673 = vld [vmem:[#allocation12 + $0x90] sm:$0xff]
    %v674 = vld [vmem:[#allocation12 + $0x98] sm:$0xff]
    %v675 = vld [vmem:[#allocation12 + $0xa0] sm:$0xff]
    %v676 = vld [vmem:[#allocation12 + $0xa8] sm:$0xff]
    %v677 = vld [vmem:[#allocation12 + $0xb0] sm:$0xff]
    %v678 = vld [vmem:[#allocation12 + $0xb8] sm:$0xff]
    %v679 = vld [vmem:[#allocation12 + $0xc0] sm:$0xff]
    %v680 = vld [vmem:[#allocation12 + $0xc8] sm:$0xff]
    %v681 = vld [vmem:[#allocation12 + $0xd0] sm:$0xff]
    %v682 = vld [vmem:[#allocation12 + $0xd8] sm:$0xff]
    %v683 = vld [vmem:[#allocation12 + $0xe0] sm:$0xff]
    %v684 = vld [vmem:[#allocation12 + $0xe8] sm:$0xff]
    %v685 = vld [vmem:[#allocation12 + $0xf0] sm:$0xff]
    %v686 = vld [vmem:[#allocation12 + $0xf8] sm:$0xff]
    %v687 = vld [vmem:[#allocation12 + $0x100] sm:$0xff]
    %v688 = vld [vmem:[#allocation12 + $0x108] sm:$0xff]
    %v689 = vld [vmem:[#allocation12 + $0x110] sm:$0xff]
    %v690 = vld [vmem:[#allocation12 + $0x118] sm:$0xff]
    %v691 = vld [vmem:[#allocation12 + $0x120] sm:$0xff]
    %v692 = vld [vmem:[#allocation12 + $0x128] sm:$0xff]
    %v693 = vld [vmem:[#allocation12 + $0x130] sm:$0xff]
    %v694 = vld [vmem:[#allocation12 + $0x138] sm:$0xff]
    %v695 = vld [vmem:[#allocation12 + $0x140] sm:$0xff]
    %v696 = vld [vmem:[#allocation12 + $0x148] sm:$0xff]
    %v697 = vld [vmem:[#allocation12 + $0x150] sm:$0xff]
    %v698 = vld [vmem:[#allocation12 + $0x158] sm:$0xff]
    %v699 = vld [vmem:[#allocation12 + $0x160] sm:$0xff]
    %v700 = vld [vmem:[#allocation12 + $0x168] sm:$0xff]
    %v701 = vld [vmem:[#allocation12 + $0x170] sm:$0xff]
    %v702 = vld [vmem:[#allocation12 + $0x178] sm:$0xff]
    %703 = vmatpush.msra.mxu0 %v700
    %704 = vmatpush.msra.mxu0 %v697
    %705 = vmatpush.msra.mxu0 %v694
    %706 = vmatpush.msra.mxu0 %v691
    %707 = vmatpush.msra.mxu0 %v688
    %708 = vmatpush.msra.mxu0 %v685
    %709 = vmatpush.msra.mxu0 %v682
    %710 = vmatpush.msra.mxu0 %v679
    %711 = vmatpush.msra.mxu0 %v676
    %712 = vmatpush.msra.mxu0 %v673
    %713 = vmatpush.msra.mxu0 %v670
    %714 = vmatpush.msra.mxu0 %v667
    %715 = vmatpush.msra.mxu0 %v664
    %716 = vmatpush.msra.mxu0 %v661
    %717 = vmatpush.msra.mxu0 %v658
    %718 = vmatpush.msra.mxu0 %v655
    %719 = vmatmul.f32.gmra.mxu0 %v648
    %v720 = vpop.f32.mrf.mxu0
    %v721 = vadd.f32 0.0, %v720
    %722 = vdwg.mxu0
    %723 = vmatpush.msra.mxu0 %v701
    %724 = vmatpush.msra.mxu0 %v698
    %725 = vmatpush.msra.mxu0 %v695
    %726 = vmatpush.msra.mxu0 %v692
    %727 = vmatpush.msra.mxu0 %v689
    %728 = vmatpush.msra.mxu0 %v686
    %729 = vmatpush.msra.mxu0 %v683
    %730 = vmatpush.msra.mxu0 %v680
    %731 = vmatpush.msra.mxu0 %v677
    %732 = vmatpush.msra.mxu0 %v674
    %733 = vmatpush.msra.mxu0 %v671
    %734 = vmatpush.msra.mxu0 %v668
    %735 = vmatpush.msra.mxu0 %v665
    %736 = vmatpush.msra.mxu0 %v662
    %737 = vmatpush.msra.mxu0 %v659
    %738 = vmatpush.msra.mxu0 %v656
    %739 = vmatmul.f32.gmra.mxu0 %v648
    %v740 = vpop.f32.mrf.mxu0
    %v741 = vadd.f32 0.0, %v740
    %742 = vdwg.mxu0
    %743 = vmatpush.msra.mxu0 %v702
    %744 = vmatpush.msra.mxu0 %v699
    %745 = vmatpush.msra.mxu0 %v696
    %746 = vmatpush.msra.mxu0 %v693
    %747 = vmatpush.msra.mxu0 %v690
    %748 = vmatpush.msra.mxu0 %v687
    %749 = vmatpush.msra.mxu0 %v684
    %750 = vmatpush.msra.mxu0 %v681
    %751 = vmatpush.msra.mxu0 %v678
    %752 = vmatpush.msra.mxu0 %v675
    %753 = vmatpush.msra.mxu0 %v672
    %754 = vmatpush.msra.mxu0 %v669
    %755 = vmatpush.msra.mxu0 %v666
    %756 = vmatpush.msra.mxu0 %v663
    %757 = vmatpush.msra.mxu0 %v660
    %758 = vmatpush.msra.mxu0 %v657
    %759 = vmatmul.f32.gmra.mxu0 %v648
    %v760 = vpop.f32.mrf.mxu0
    %v761 = vadd.f32 0.0, %v760
    %762 = vdwg.mxu0
    %v763 = vadd.f32 %v652, %v721
    %v764 = vxor.u32 %v763, 2147483648
    %v765 = vmul.f32 %v764, 1.442695
    %v766 = vpow.pop %v765
    %v767 = vadd.f32 %v766, 1.0
    %v768 = vrcp.pop %v767
    %v769 = vmul.f32 %v767, %v768
    %v770 = vsub.f32 1.0, %v769
    %v771 = vmul.f32 %v768, %v770
    %v772 = vadd.f32 %v768, %v771
    %vm773 = vweird.f32 %v767
    %vm774 = vweird.f32 %v768
    %vm775 = vmor %vm773, %vm774
    %v776 = vsel %vm775, %v768, %v772
    %v777 = vand.u32 2147483647, %v767
    %vm778 = vcmp.eq.f32.partialorder %v777, 8.507059e+37
    %v779 = vand.u32 %v767, 2147483648
    %v780 = vor.u32 1.1754944e-38, %v779
    %v781 = vsel %vm778, %v780, %v776
    %v782 = vmul.f32 1.0, %v781
    %v783 = vadd.f32 %v653, %v741
    %v784 = vxor.u32 %v783, 2147483648
    %v785 = vmul.f32 %v784, 1.442695
    %v786 = vpow.pop %v785
    %v787 = vadd.f32 %v786, 1.0
    %v788 = vrcp.pop %v787
    %v789 = vmul.f32 %v787, %v788
    %v790 = vsub.f32 1.0, %v789
    %v791 = vmul.f32 %v788, %v790
    %v792 = vadd.f32 %v788, %v791
    %vm793 = vweird.f32 %v787
    %vm794 = vweird.f32 %v788
    %vm795 = vmor %vm793, %vm794
    %v796 = vsel %vm795, %v788, %v792
    %v797 = vand.u32 2147483647, %v787
    %vm798 = vcmp.eq.f32.partialorder %v797, 8.507059e+37
    %v799 = vand.u32 %v787, 2147483648
    %v800 = vor.u32 1.1754944e-38, %v799
    %v801 = vsel %vm798, %v800, %v796
    %v802 = vmul.f32 1.0, %v801
    %v803 = vmul.f32 %v782, %v761
    %v804 = vadd.f32 %v654, %v803
    %v805 = vtanh.pop %v804
    %v806 = vsub.f32 %v648, %v805
    %v807 = vmul.f32 %v802, %v806
    %v808 = vadd.f32 %v805, %v807
    %s809 = scalar_lea.vmem [#allocation3], 16
    %810 = vst [vmem:[%s809] sm:$0xff] %v808
    %s811 = scalar_lea.vmem [#allocation2], 72
    %v812 = vld [vmem:[%s811] sm:$0xff]
    %v813 = vld [vmem:[%s811 + $0x8] sm:$0xff]
    %v814 = vld [vmem:[%s811 + $0x10] sm:$0xff]
    %v815 = vld [vmem:[#allocation12] sm:$0xff]
    %v816 = vld [vmem:[#allocation12 + $0x8] sm:$0xff]
    %v817 = vld [vmem:[#allocation12 + $0x10] sm:$0xff]
    %v818 = vld [vmem:[#allocation12 + $0x18] sm:$0xff]
    %v819 = vld [vmem:[#allocation12 + $0x20] sm:$0xff]
    %v820 = vld [vmem:[#allocation12 + $0x28] sm:$0xff]
    %v821 = vld [vmem:[#allocation12 + $0x30] sm:$0xff]
    %v822 = vld [vmem:[#allocation12 + $0x38] sm:$0xff]
    %v823 = vld [vmem:[#allocation12 + $0x40] sm:$0xff]
    %v824 = vld [vmem:[#allocation12 + $0x48] sm:$0xff]
    %v825 = vld [vmem:[#allocation12 + $0x50] sm:$0xff]
    %v826 = vld [vmem:[#allocation12 + $0x58] sm:$0xff]
    %v827 = vld [vmem:[#allocation12 + $0x60] sm:$0xff]
    %v828 = vld [vmem:[#allocation12 + $0x68] sm:$0xff]
    %v829 = vld [vmem:[#allocation12 + $0x70] sm:$0xff]
    %v830 = vld [vmem:[#allocation12 + $0x78] sm:$0xff]
    %v831 = vld [vmem:[#allocation12 + $0x80] sm:$0xff]
    %v832 = vld [vmem:[#allocation12 + $0x88] sm:$0xff]
    %v833 = vld [vmem:[#allocation12 + $0x90] sm:$0xff]
    %v834 = vld [vmem:[#allocation12 + $0x98] sm:$0xff]
    %v835 = vld [vmem:[#allocation12 + $0xa0] sm:$0xff]
    %v836 = vld [vmem:[#allocation12 + $0xa8] sm:$0xff]
    %v837 = vld [vmem:[#allocation12 + $0xb0] sm:$0xff]
    %v838 = vld [vmem:[#allocation12 + $0xb8] sm:$0xff]
    %v839 = vld [vmem:[#allocation12 + $0xc0] sm:$0xff]
    %v840 = vld [vmem:[#allocation12 + $0xc8] sm:$0xff]
    %v841 = vld [vmem:[#allocation12 + $0xd0] sm:$0xff]
    %v842 = vld [vmem:[#allocation12 + $0xd8] sm:$0xff]
    %v843 = vld [vmem:[#allocation12 + $0xe0] sm:$0xff]
    %v844 = vld [vmem:[#allocation12 + $0xe8] sm:$0xff]
    %v845 = vld [vmem:[#allocation12 + $0xf0] sm:$0xff]
    %v846 = vld [vmem:[#allocation12 + $0xf8] sm:$0xff]
    %v847 = vld [vmem:[#allocation12 + $0x100] sm:$0xff]
    %v848 = vld [vmem:[#allocation12 + $0x108] sm:$0xff]
    %v849 = vld [vmem:[#allocation12 + $0x110] sm:$0xff]
    %v850 = vld [vmem:[#allocation12 + $0x118] sm:$0xff]
    %v851 = vld [vmem:[#allocation12 + $0x120] sm:$0xff]
    %v852 = vld [vmem:[#allocation12 + $0x128] sm:$0xff]
    %v853 = vld [vmem:[#allocation12 + $0x130] sm:$0xff]
    %v854 = vld [vmem:[#allocation12 + $0x138] sm:$0xff]
    %v855 = vld [vmem:[#allocation12 + $0x140] sm:$0xff]
    %v856 = vld [vmem:[#allocation12 + $0x148] sm:$0xff]
    %v857 = vld [vmem:[#allocation12 + $0x150] sm:$0xff]
    %v858 = vld [vmem:[#allocation12 + $0x158] sm:$0xff]
    %v859 = vld [vmem:[#allocation12 + $0x160] sm:$0xff]
    %v860 = vld [vmem:[#allocation12 + $0x168] sm:$0xff]
    %v861 = vld [vmem:[#allocation12 + $0x170] sm:$0xff]
    %v862 = vld [vmem:[#allocation12 + $0x178] sm:$0xff]
    %863 = vmatpush.msra.mxu0 %v860
    %864 = vmatpush.msra.mxu0 %v857
    %865 = vmatpush.msra.mxu0 %v854
    %866 = vmatpush.msra.mxu0 %v851
    %867 = vmatpush.msra.mxu0 %v848
    %868 = vmatpush.msra.mxu0 %v845
    %869 = vmatpush.msra.mxu0 %v842
    %870 = vmatpush.msra.mxu0 %v839
    %871 = vmatpush.msra.mxu0 %v836
    %872 = vmatpush.msra.mxu0 %v833
    %873 = vmatpush.msra.mxu0 %v830
    %874 = vmatpush.msra.mxu0 %v827
    %875 = vmatpush.msra.mxu0 %v824
    %876 = vmatpush.msra.mxu0 %v821
    %877 = vmatpush.msra.mxu0 %v818
    %878 = vmatpush.msra.mxu0 %v815
    %879 = vmatmul.f32.gmra.mxu0 %v808
    %v880 = vpop.f32.mrf.mxu0
    %v881 = vadd.f32 0.0, %v880
    %882 = vdwg.mxu0
    %883 = vmatpush.msra.mxu0 %v861
    %884 = vmatpush.msra.mxu0 %v858
    %885 = vmatpush.msra.mxu0 %v855
    %886 = vmatpush.msra.mxu0 %v852
    %887 = vmatpush.msra.mxu0 %v849
    %888 = vmatpush.msra.mxu0 %v846
    %889 = vmatpush.msra.mxu0 %v843
    %890 = vmatpush.msra.mxu0 %v840
    %891 = vmatpush.msra.mxu0 %v837
    %892 = vmatpush.msra.mxu0 %v834
    %893 = vmatpush.msra.mxu0 %v831
    %894 = vmatpush.msra.mxu0 %v828
    %895 = vmatpush.msra.mxu0 %v825
    %896 = vmatpush.msra.mxu0 %v822
    %897 = vmatpush.msra.mxu0 %v819
    %898 = vmatpush.msra.mxu0 %v816
    %899 = vmatmul.f32.gmra.mxu0 %v808
    %v900 = vpop.f32.mrf.mxu0
    %v901 = vadd.f32 0.0, %v900
    %902 = vdwg.mxu0
    %903 = vmatpush.msra.mxu0 %v862
    %904 = vmatpush.msra.mxu0 %v859
    %905 = vmatpush.msra.mxu0 %v856
    %906 = vmatpush.msra.mxu0 %v853
    %907 = vmatpush.msra.mxu0 %v850
    %908 = vmatpush.msra.mxu0 %v847
    %909 = vmatpush.msra.mxu0 %v844
    %910 = vmatpush.msra.mxu0 %v841
    %911 = vmatpush.msra.mxu0 %v838
    %912 = vmatpush.msra.mxu0 %v835
    %913 = vmatpush.msra.mxu0 %v832
    %914 = vmatpush.msra.mxu0 %v829
    %915 = vmatpush.msra.mxu0 %v826
    %916 = vmatpush.msra.mxu0 %v823
    %917 = vmatpush.msra.mxu0 %v820
    %918 = vmatpush.msra.mxu0 %v817
    %919 = vmatmul.f32.gmra.mxu0 %v808
    %v920 = vpop.f32.mrf.mxu0
    %v921 = vadd.f32 0.0, %v920
    %922 = vdwg.mxu0
    %v923 = vadd.f32 %v812, %v881
    %v924 = vxor.u32 %v923, 2147483648
    %v925 = vmul.f32 %v924, 1.442695
    %v926 = vpow.pop %v925
    %v927 = vadd.f32 %v926, 1.0
    %v928 = vrcp.pop %v927
    %v929 = vmul.f32 %v927, %v928
    %v930 = vsub.f32 1.0, %v929
    %v931 = vmul.f32 %v928, %v930
    %v932 = vadd.f32 %v928, %v931
    %vm933 = vweird.f32 %v927
    %vm934 = vweird.f32 %v928
    %vm935 = vmor %vm933, %vm934
    %v936 = vsel %vm935, %v928, %v932
    %v937 = vand.u32 2147483647, %v927
    %vm938 = vcmp.eq.f32.partialorder %v937, 8.507059e+37
    %v939 = vand.u32 %v927, 2147483648
    %v940 = vor.u32 1.1754944e-38, %v939
    %v941 = vsel %vm938, %v940, %v936
    %v942 = vmul.f32 1.0, %v941
    %v943 = vadd.f32 %v813, %v901
    %v944 = vxor.u32 %v943, 2147483648
    %v945 = vmul.f32 %v944, 1.442695
    %v946 = vpow.pop %v945
    %v947 = vadd.f32 %v946, 1.0
    %v948 = vrcp.pop %v947
    %v949 = vmul.f32 %v947, %v948
    %v950 = vsub.f32 1.0, %v949
    %v951 = vmul.f32 %v948, %v950
    %v952 = vadd.f32 %v948, %v951
    %vm953 = vweird.f32 %v947
    %vm954 = vweird.f32 %v948
    %vm955 = vmor %vm953, %vm954
    %v956 = vsel %vm955, %v948, %v952
    %v957 = vand.u32 2147483647, %v947
    %vm958 = vcmp.eq.f32.partialorder %v957, 8.507059e+37
    %v959 = vand.u32 %v947, 2147483648
    %v960 = vor.u32 1.1754944e-38, %v959
    %v961 = vsel %vm958, %v960, %v956
    %v962 = vmul.f32 1.0, %v961
    %v963 = vmul.f32 %v942, %v921
    %v964 = vadd.f32 %v814, %v963
    %v965 = vtanh.pop %v964
    %v966 = vsub.f32 %v808, %v965
    %v967 = vmul.f32 %v962, %v966
    %v968 = vadd.f32 %v965, %v967
    %s969 = scalar_lea.vmem [#allocation3], 24
    %970 = vst [vmem:[%s969] sm:$0xff] %v968
    %s971 = scalar_lea.vmem [#allocation2], 96
    %v972 = vld [vmem:[%s971] sm:$0xff]
    %v973 = vld [vmem:[%s971 + $0x8] sm:$0xff]
    %v974 = vld [vmem:[%s971 + $0x10] sm:$0xff]
    %v975 = vld [vmem:[#allocation12] sm:$0xff]
    %v976 = vld [vmem:[#allocation12 + $0x8] sm:$0xff]
    %v977 = vld [vmem:[#allocation12 + $0x10] sm:$0xff]
    %v978 = vld [vmem:[#allocation12 + $0x18] sm:$0xff]
    %v979 = vld [vmem:[#allocation12 + $0x20] sm:$0xff]
    %v980 = vld [vmem:[#allocation12 + $0x28] sm:$0xff]
    %v981 = vld [vmem:[#allocation12 + $0x30] sm:$0xff]
    %v982 = vld [vmem:[#allocation12 + $0x38] sm:$0xff]
    %v983 = vld [vmem:[#allocation12 + $0x40] sm:$0xff]
    %v984 = vld [vmem:[#allocation12 + $0x48] sm:$0xff]
    %v985 = vld [vmem:[#allocation12 + $0x50] sm:$0xff]
    %v986 = vld [vmem:[#allocation12 + $0x58] sm:$0xff]
    %v987 = vld [vmem:[#allocation12 + $0x60] sm:$0xff]
    %v988 = vld [vmem:[#allocation12 + $0x68] sm:$0xff]
    %v989 = vld [vmem:[#allocation12 + $0x70] sm:$0xff]
    %v990 = vld [vmem:[#allocation12 + $0x78] sm:$0xff]
    %v991 = vld [vmem:[#allocation12 + $0x80] sm:$0xff]
    %v992 = vld [vmem:[#allocation12 + $0x88] sm:$0xff]
    %v993 = vld [vmem:[#allocation12 + $0x90] sm:$0xff]
    %v994 = vld [vmem:[#allocation12 + $0x98] sm:$0xff]
    %v995 = vld [vmem:[#allocation12 + $0xa0] sm:$0xff]
    %v996 = vld [vmem:[#allocation12 + $0xa8] sm:$0xff]
    %v997 = vld [vmem:[#allocation12 + $0xb0] sm:$0xff]
    %v998 = vld [vmem:[#allocation12 + $0xb8] sm:$0xff]
    %v999 = vld [vmem:[#allocation12 + $0xc0] sm:$0xff]
    %v1000 = vld [vmem:[#allocation12 + $0xc8] sm:$0xff]
    %v1001 = vld [vmem:[#allocation12 + $0xd0] sm:$0xff]
    %v1002 = vld [vmem:[#allocation12 + $0xd8] sm:$0xff]
    %v1003 = vld [vmem:[#allocation12 + $0xe0] sm:$0xff]
    %v1004 = vld [vmem:[#allocation12 + $0xe8] sm:$0xff]
    %v1005 = vld [vmem:[#allocation12 + $0xf0] sm:$0xff]
    %v1006 = vld [vmem:[#allocation12 + $0xf8] sm:$0xff]
    %v1007 = vld [vmem:[#allocation12 + $0x100] sm:$0xff]
    %v1008 = vld [vmem:[#allocation12 + $0x108] sm:$0xff]
    %v1009 = vld [vmem:[#allocation12 + $0x110] sm:$0xff]
    %v1010 = vld [vmem:[#allocation12 + $0x118] sm:$0xff]
    %v1011 = vld [vmem:[#allocation12 + $0x120] sm:$0xff]
    %v1012 = vld [vmem:[#allocation12 + $0x128] sm:$0xff]
    %v1013 = vld [vmem:[#allocation12 + $0x130] sm:$0xff]
    %v1014 = vld [vmem:[#allocation12 + $0x138] sm:$0xff]
    %v1015 = vld [vmem:[#allocation12 + $0x140] sm:$0xff]
    %v1016 = vld [vmem:[#allocation12 + $0x148] sm:$0xff]
    %v1017 = vld [vmem:[#allocation12 + $0x150] sm:$0xff]
    %v1018 = vld [vmem:[#allocation12 + $0x158] sm:$0xff]
    %v1019 = vld [vmem:[#allocation12 + $0x160] sm:$0xff]
    %v1020 = vld [vmem:[#allocation12 + $0x168] sm:$0xff]
    %v1021 = vld [vmem:[#allocation12 + $0x170] sm:$0xff]
    %v1022 = vld [vmem:[#allocation12 + $0x178] sm:$0xff]
    %1023 = vmatpush.msra.mxu0 %v1020
    %1024 = vmatpush.msra.mxu0 %v1017
    %1025 = vmatpush.msra.mxu0 %v1014
    %1026 = vmatpush.msra.mxu0 %v1011
    %1027 = vmatpush.msra.mxu0 %v1008
    %1028 = vmatpush.msra.mxu0 %v1005
    %1029 = vmatpush.msra.mxu0 %v1002
    %1030 = vmatpush.msra.mxu0 %v999
    %1031 = vmatpush.msra.mxu0 %v996
    %1032 = vmatpush.msra.mxu0 %v993
    %1033 = vmatpush.msra.mxu0 %v990
    %1034 = vmatpush.msra.mxu0 %v987
    %1035 = vmatpush.msra.mxu0 %v984
    %1036 = vmatpush.msra.mxu0 %v981
    %1037 = vmatpush.msra.mxu0 %v978
    %1038 = vmatpush.msra.mxu0 %v975
    %1039 = vmatmul.f32.gmra.mxu0 %v968
    %v1040 = vpop.f32.mrf.mxu0
    %v1041 = vadd.f32 0.0, %v1040
    %1042 = vdwg.mxu0
    %1043 = vmatpush.msra.mxu0 %v1021
    %1044 = vmatpush.msra.mxu0 %v1018
    %1045 = vmatpush.msra.mxu0 %v1015
    %1046 = vmatpush.msra.mxu0 %v1012
    %1047 = vmatpush.msra.mxu0 %v1009
    %1048 = vmatpush.msra.mxu0 %v1006
    %1049 = vmatpush.msra.mxu0 %v1003
    %1050 = vmatpush.msra.mxu0 %v1000
    %1051 = vmatpush.msra.mxu0 %v997
    %1052 = vmatpush.msra.mxu0 %v994
    %1053 = vmatpush.msra.mxu0 %v991
    %1054 = vmatpush.msra.mxu0 %v988
    %1055 = vmatpush.msra.mxu0 %v985
    %1056 = vmatpush.msra.mxu0 %v982
    %1057 = vmatpush.msra.mxu0 %v979
    %1058 = vmatpush.msra.mxu0 %v976
    %1059 = vmatmul.f32.gmra.mxu0 %v968
    %v1060 = vpop.f32.mrf.mxu0
    %v1061 = vadd.f32 0.0, %v1060
    %1062 = vdwg.mxu0
    %1063 = vmatpush.msra.mxu0 %v1022
    %1064 = vmatpush.msra.mxu0 %v1019
    %1065 = vmatpush.msra.mxu0 %v1016
    %1066 = vmatpush.msra.mxu0 %v1013
    %1067 = vmatpush.msra.mxu0 %v1010
    %1068 = vmatpush.msra.mxu0 %v1007
    %1069 = vmatpush.msra.mxu0 %v1004
    %1070 = vmatpush.msra.mxu0 %v1001
    %1071 = vmatpush.msra.mxu0 %v998
    %1072 = vmatpush.msra.mxu0 %v995
    %1073 = vmatpush.msra.mxu0 %v992
    %1074 = vmatpush.msra.mxu0 %v989
    %1075 = vmatpush.msra.mxu0 %v986
    %1076 = vmatpush.msra.mxu0 %v983
    %1077 = vmatpush.msra.mxu0 %v980
    %1078 = vmatpush.msra.mxu0 %v977
    %1079 = vmatmul.f32.gmra.mxu0 %v968
    %v1080 = vpop.f32.mrf.mxu0
    %v1081 = vadd.f32 0.0, %v1080
    %1082 = vdwg.mxu0
    %v1083 = vadd.f32 %v972, %v1041
    %v1084 = vxor.u32 %v1083, 2147483648
    %v1085 = vmul.f32 %v1084, 1.442695
    %v1086 = vpow.pop %v1085
    %v1087 = vadd.f32 %v1086, 1.0
    %v1088 = vrcp.pop %v1087
    %v1089 = vmul.f32 %v1087, %v1088
    %v1090 = vsub.f32 1.0, %v1089
    %v1091 = vmul.f32 %v1088, %v1090
    %v1092 = vadd.f32 %v1088, %v1091
    %vm1093 = vweird.f32 %v1087
    %vm1094 = vweird.f32 %v1088
    %vm1095 = vmor %vm1093, %vm1094
    %v1096 = vsel %vm1095, %v1088, %v1092
    %v1097 = vand.u32 2147483647, %v1087
    %vm1098 = vcmp.eq.f32.partialorder %v1097, 8.507059e+37
    %v1099 = vand.u32 %v1087, 2147483648
    %v1100 = vor.u32 1.1754944e-38, %v1099
    %v1101 = vsel %vm1098, %v1100, %v1096
    %v1102 = vmul.f32 1.0, %v1101
    %v1103 = vadd.f32 %v973, %v1061
    %v1104 = vxor.u32 %v1103, 2147483648
    %v1105 = vmul.f32 %v1104, 1.442695
    %v1106 = vpow.pop %v1105
    %v1107 = vadd.f32 %v1106, 1.0
    %v1108 = vrcp.pop %v1107
    %v1109 = vmul.f32 %v1107, %v1108
    %v1110 = vsub.f32 1.0, %v1109
    %v1111 = vmul.f32 %v1108, %v1110
    %v1112 = vadd.f32 %v1108, %v1111
    %vm1113 = vweird.f32 %v1107
    %vm1114 = vweird.f32 %v1108
    %vm1115 = vmor %vm1113, %vm1114
    %v1116 = vsel %vm1115, %v1108, %v1112
    %v1117 = vand.u32 2147483647, %v1107
    %vm1118 = vcmp.eq.f32.partialorder %v1117, 8.507059e+37
    %v1119 = vand.u32 %v1107, 2147483648
    %v1120 = vor.u32 1.1754944e-38, %v1119
    %v1121 = vsel %vm1118, %v1120, %v1116
    %v1122 = vmul.f32 1.0, %v1121
    %v1123 = vmul.f32 %v1102, %v1081
    %v1124 = vadd.f32 %v974, %v1123
    %v1125 = vtanh.pop %v1124
    %v1126 = vsub.f32 %v968, %v1125
    %v1127 = vmul.f32 %v1122, %v1126
    %v1128 = vadd.f32 %v1125, %v1127
    %s1129 = scalar_lea.vmem [#allocation3], 32
    %1130 = vst [vmem:[%s1129] sm:$0xff] %v1128
    %s1131 = scalar_lea.vmem [#allocation2], 120
    %v1132 = vld [vmem:[%s1131] sm:$0xff]
    %v1133 = vld [vmem:[%s1131 + $0x8] sm:$0xff]
    %v1134 = vld [vmem:[%s1131 + $0x10] sm:$0xff]
    %v1135 = vld [vmem:[#allocation12] sm:$0xff]
    %v1136 = vld [vmem:[#allocation12 + $0x8] sm:$0xff]
    %v1137 = vld [vmem:[#allocation12 + $0x10] sm:$0xff]
    %v1138 = vld [vmem:[#allocation12 + $0x18] sm:$0xff]
    %v1139 = vld [vmem:[#allocation12 + $0x20] sm:$0xff]
    %v1140 = vld [vmem:[#allocation12 + $0x28] sm:$0xff]
    %v1141 = vld [vmem:[#allocation12 + $0x30] sm:$0xff]
    %v1142 = vld [vmem:[#allocation12 + $0x38] sm:$0xff]
    %v1143 = vld [vmem:[#allocation12 + $0x40] sm:$0xff]
    %v1144 = vld [vmem:[#allocation12 + $0x48] sm:$0xff]
    %v1145 = vld [vmem:[#allocation12 + $0x50] sm:$0xff]
    %v1146 = vld [vmem:[#allocation12 + $0x58] sm:$0xff]
    %v1147 = vld [vmem:[#allocation12 + $0x60] sm:$0xff]
    %v1148 = vld [vmem:[#allocation12 + $0x68] sm:$0xff]
    %v1149 = vld [vmem:[#allocation12 + $0x70] sm:$0xff]
    %v1150 = vld [vmem:[#allocation12 + $0x78] sm:$0xff]
    %v1151 = vld [vmem:[#allocation12 + $0x80] sm:$0xff]
    %v1152 = vld [vmem:[#allocation12 + $0x88] sm:$0xff]
    %v1153 = vld [vmem:[#allocation12 + $0x90] sm:$0xff]
    %v1154 = vld [vmem:[#allocation12 + $0x98] sm:$0xff]
    %v1155 = vld [vmem:[#allocation12 + $0xa0] sm:$0xff]
    %v1156 = vld [vmem:[#allocation12 + $0xa8] sm:$0xff]
    %v1157 = vld [vmem:[#allocation12 + $0xb0] sm:$0xff]
    %v1158 = vld [vmem:[#allocation12 + $0xb8] sm:$0xff]
    %v1159 = vld [vmem:[#allocation12 + $0xc0] sm:$0xff]
    %v1160 = vld [vmem:[#allocation12 + $0xc8] sm:$0xff]
    %v1161 = vld [vmem:[#allocation12 + $0xd0] sm:$0xff]
    %v1162 = vld [vmem:[#allocation12 + $0xd8] sm:$0xff]
    %v1163 = vld [vmem:[#allocation12 + $0xe0] sm:$0xff]
    %v1164 = vld [vmem:[#allocation12 + $0xe8] sm:$0xff]
    %v1165 = vld [vmem:[#allocation12 + $0xf0] sm:$0xff]
    %v1166 = vld [vmem:[#allocation12 + $0xf8] sm:$0xff]
    %v1167 = vld [vmem:[#allocation12 + $0x100] sm:$0xff]
    %v1168 = vld [vmem:[#allocation12 + $0x108] sm:$0xff]
    %v1169 = vld [vmem:[#allocation12 + $0x110] sm:$0xff]
    %v1170 = vld [vmem:[#allocation12 + $0x118] sm:$0xff]
    %v1171 = vld [vmem:[#allocation12 + $0x120] sm:$0xff]
    %v1172 = vld [vmem:[#allocation12 + $0x128] sm:$0xff]
    %v1173 = vld [vmem:[#allocation12 + $0x130] sm:$0xff]
    %v1174 = vld [vmem:[#allocation12 + $0x138] sm:$0xff]
    %v1175 = vld [vmem:[#allocation12 + $0x140] sm:$0xff]
    %v1176 = vld [vmem:[#allocation12 + $0x148] sm:$0xff]
    %v1177 = vld [vmem:[#allocation12 + $0x150] sm:$0xff]
    %v1178 = vld [vmem:[#allocation12 + $0x158] sm:$0xff]
    %v1179 = vld [vmem:[#allocation12 + $0x160] sm:$0xff]
    %v1180 = vld [vmem:[#allocation12 + $0x168] sm:$0xff]
    %v1181 = vld [vmem:[#allocation12 + $0x170] sm:$0xff]
    %v1182 = vld [vmem:[#allocation12 + $0x178] sm:$0xff]
    %1183 = vmatpush.msra.mxu0 %v1180
    %1184 = vmatpush.msra.mxu0 %v1177
    %1185 = vmatpush.msra.mxu0 %v1174
    %1186 = vmatpush.msra.mxu0 %v1171
    %1187 = vmatpush.msra.mxu0 %v1168
    %1188 = vmatpush.msra.mxu0 %v1165
    %1189 = vmatpush.msra.mxu0 %v1162
    %1190 = vmatpush.msra.mxu0 %v1159
    %1191 = vmatpush.msra.mxu0 %v1156
    %1192 = vmatpush.msra.mxu0 %v1153
    %1193 = vmatpush.msra.mxu0 %v1150
    %1194 = vmatpush.msra.mxu0 %v1147
    %1195 = vmatpush.msra.mxu0 %v1144
    %1196 = vmatpush.msra.mxu0 %v1141
    %1197 = vmatpush.msra.mxu0 %v1138
    %1198 = vmatpush.msra.mxu0 %v1135
    %1199 = vmatmul.f32.gmra.mxu0 %v1128
    %v1200 = vpop.f32.mrf.mxu0
    %v1201 = vadd.f32 0.0, %v1200
    %1202 = vdwg.mxu0
    %1203 = vmatpush.msra.mxu0 %v1181
    %1204 = vmatpush.msra.mxu0 %v1178
    %1205 = vmatpush.msra.mxu0 %v1175
    %1206 = vmatpush.msra.mxu0 %v1172
    %1207 = vmatpush.msra.mxu0 %v1169
    %1208 = vmatpush.msra.mxu0 %v1166
    %1209 = vmatpush.msra.mxu0 %v1163
    %1210 = vmatpush.msra.mxu0 %v1160
    %1211 = vmatpush.msra.mxu0 %v1157
    %1212 = vmatpush.msra.mxu0 %v1154
    %1213 = vmatpush.msra.mxu0 %v1151
    %1214 = vmatpush.msra.mxu0 %v1148
    %1215 = vmatpush.msra.mxu0 %v1145
    %1216 = vmatpush.msra.mxu0 %v1142
    %1217 = vmatpush.msra.mxu0 %v1139
    %1218 = vmatpush.msra.mxu0 %v1136
    %1219 = vmatmul.f32.gmra.mxu0 %v1128
    %v1220 = vpop.f32.mrf.mxu0
    %v1221 = vadd.f32 0.0, %v1220
    %1222 = vdwg.mxu0
    %1223 = vmatpush.msra.mxu0 %v1182
    %1224 = vmatpush.msra.mxu0 %v1179
    %1225 = vmatpush.msra.mxu0 %v1176
    %1226 = vmatpush.msra.mxu0 %v1173
    %1227 = vmatpush.msra.mxu0 %v1170
    %1228 = vmatpush.msra.mxu0 %v1167
    %1229 = vmatpush.msra.mxu0 %v1164
    %1230 = vmatpush.msra.mxu0 %v1161
    %1231 = vmatpush.msra.mxu0 %v1158
    %1232 = vmatpush.msra.mxu0 %v1155
    %1233 = vmatpush.msra.mxu0 %v1152
    %1234 = vmatpush.msra.mxu0 %v1149
    %1235 = vmatpush.msra.mxu0 %v1146
    %1236 = vmatpush.msra.mxu0 %v1143
    %1237 = vmatpush.msra.mxu0 %v1140
    %1238 = vmatpush.msra.mxu0 %v1137
    %1239 = vmatmul.f32.gmra.mxu0 %v1128
    %v1240 = vpop.f32.mrf.mxu0
    %v1241 = vadd.f32 0.0, %v1240
    %1242 = vdwg.mxu0
    %v1243 = vadd.f32 %v1132, %v1201
    %v1244 = vxor.u32 %v1243, 2147483648
    %v1245 = vmul.f32 %v1244, 1.442695
    %v1246 = vpow.pop %v1245
    %v1247 = vadd.f32 %v1246, 1.0
    %v1248 = vrcp.pop %v1247
    %v1249 = vmul.f32 %v1247, %v1248
    %v1250 = vsub.f32 1.0, %v1249
    %v1251 = vmul.f32 %v1248, %v1250
    %v1252 = vadd.f32 %v1248, %v1251
    %vm1253 = vweird.f32 %v1247
    %vm1254 = vweird.f32 %v1248
    %vm1255 = vmor %vm1253, %vm1254
    %v1256 = vsel %vm1255, %v1248, %v1252
    %v1257 = vand.u32 2147483647, %v1247
    %vm1258 = vcmp.eq.f32.partialorder %v1257, 8.507059e+37
    %v1259 = vand.u32 %v1247, 2147483648
    %v1260 = vor.u32 1.1754944e-38, %v1259
    %v1261 = vsel %vm1258, %v1260, %v1256
    %v1262 = vmul.f32 1.0, %v1261
    %v1263 = vadd.f32 %v1133, %v1221
    %v1264 = vxor.u32 %v1263, 2147483648
    %v1265 = vmul.f32 %v1264, 1.442695
    %v1266 = vpow.pop %v1265
    %v1267 = vadd.f32 %v1266, 1.0
    %v1268 = vrcp.pop %v1267
    %v1269 = vmul.f32 %v1267, %v1268
    %v1270 = vsub.f32 1.0, %v1269
    %v1271 = vmul.f32 %v1268, %v1270
    %v1272 = vadd.f32 %v1268, %v1271
    %vm1273 = vweird.f32 %v1267
    %vm1274 = vweird.f32 %v1268
    %vm1275 = vmor %vm1273, %vm1274
    %v1276 = vsel %vm1275, %v1268, %v1272
    %v1277 = vand.u32 2147483647, %v1267
    %vm1278 = vcmp.eq.f32.partialorder %v1277, 8.507059e+37
    %v1279 = vand.u32 %v1267, 2147483648
    %v1280 = vor.u32 1.1754944e-38, %v1279
    %v1281 = vsel %vm1278, %v1280, %v1276
    %v1282 = vmul.f32 1.0, %v1281
    %v1283 = vmul.f32 %v1262, %v1241
    %v1284 = vadd.f32 %v1134, %v1283
    %v1285 = vtanh.pop %v1284
    %v1286 = vsub.f32 %v1128, %v1285
    %v1287 = vmul.f32 %v1282, %v1286
    %v1288 = vadd.f32 %v1285, %v1287
    %s1289 = scalar_lea.vmem [#allocation3], 40
    %1290 = vst [vmem:[%s1289] sm:$0xff] %v1288
    %s1291 = scalar_lea.vmem [#allocation2], 144
    %v1292 = vld [vmem:[%s1291] sm:$0xff]
    %v1293 = vld [vmem:[%s1291 + $0x8] sm:$0xff]
    %v1294 = vld [vmem:[%s1291 + $0x10] sm:$0xff]
    %v1295 = vld [vmem:[#allocation12] sm:$0xff]
    %v1296 = vld [vmem:[#allocation12 + $0x8] sm:$0xff]
    %v1297 = vld [vmem:[#allocation12 + $0x10] sm:$0xff]
    %v1298 = vld [vmem:[#allocation12 + $0x18] sm:$0xff]
    %v1299 = vld [vmem:[#allocation12 + $0x20] sm:$0xff]
    %v1300 = vld [vmem:[#allocation12 + $0x28] sm:$0xff]
    %v1301 = vld [vmem:[#allocation12 + $0x30] sm:$0xff]
    %v1302 = vld [vmem:[#allocation12 + $0x38] sm:$0xff]
    %v1303 = vld [vmem:[#allocation12 + $0x40] sm:$0xff]
    %v1304 = vld [vmem:[#allocation12 + $0x48] sm:$0xff]
    %v1305 = vld [vmem:[#allocation12 + $0x50] sm:$0xff]
    %v1306 = vld [vmem:[#allocation12 + $0x58] sm:$0xff]
    %v1307 = vld [vmem:[#allocation12 + $0x60] sm:$0xff]
    %v1308 = vld [vmem:[#allocation12 + $0x68] sm:$0xff]
    %v1309 = vld [vmem:[#allocation12 + $0x70] sm:$0xff]
    %v1310 = vld [vmem:[#allocation12 + $0x78] sm:$0xff]
    %v1311 = vld [vmem:[#allocation12 + $0x80] sm:$0xff]
    %v1312 = vld [vmem:[#allocation12 + $0x88] sm:$0xff]
    %v1313 = vld [vmem:[#allocation12 + $0x90] sm:$0xff]
    %v1314 = vld [vmem:[#allocation12 + $0x98] sm:$0xff]
    %v1315 = vld [vmem:[#allocation12 + $0xa0] sm:$0xff]
    %v1316 = vld [vmem:[#allocation12 + $0xa8] sm:$0xff]
    %v1317 = vld [vmem:[#allocation12 + $0xb0] sm:$0xff]
    %v1318 = vld [vmem:[#allocation12 + $0xb8] sm:$0xff]
    %v1319 = vld [vmem:[#allocation12 + $0xc0] sm:$0xff]
    %v1320 = vld [vmem:[#allocation12 + $0xc8] sm:$0xff]
    %v1321 = vld [vmem:[#allocation12 + $0xd0] sm:$0xff]
    %v1322 = vld [vmem:[#allocation12 + $0xd8] sm:$0xff]
    %v1323 = vld [vmem:[#allocation12 + $0xe0] sm:$0xff]
    %v1324 = vld [vmem:[#allocation12 + $0xe8] sm:$0xff]
    %v1325 = vld [vmem:[#allocation12 + $0xf0] sm:$0xff]
    %v1326 = vld [vmem:[#allocation12 + $0xf8] sm:$0xff]
    %v1327 = vld [vmem:[#allocation12 + $0x100] sm:$0xff]
    %v1328 = vld [vmem:[#allocation12 + $0x108] sm:$0xff]
    %v1329 = vld [vmem:[#allocation12 + $0x110] sm:$0xff]
    %v1330 = vld [vmem:[#allocation12 + $0x118] sm:$0xff]
    %v1331 = vld [vmem:[#allocation12 + $0x120] sm:$0xff]
    %v1332 = vld [vmem:[#allocation12 + $0x128] sm:$0xff]
    %v1333 = vld [vmem:[#allocation12 + $0x130] sm:$0xff]
    %v1334 = vld [vmem:[#allocation12 + $0x138] sm:$0xff]
    %v1335 = vld [vmem:[#allocation12 + $0x140] sm:$0xff]
    %v1336 = vld [vmem:[#allocation12 + $0x148] sm:$0xff]
    %v1337 = vld [vmem:[#allocation12 + $0x150] sm:$0xff]
    %v1338 = vld [vmem:[#allocation12 + $0x158] sm:$0xff]
    %v1339 = vld [vmem:[#allocation12 + $0x160] sm:$0xff]
    %v1340 = vld [vmem:[#allocation12 + $0x168] sm:$0xff]
    %v1341 = vld [vmem:[#allocation12 + $0x170] sm:$0xff]
    %v1342 = vld [vmem:[#allocation12 + $0x178] sm:$0xff]
    %1343 = vmatpush.msra.mxu0 %v1340
    %1344 = vmatpush.msra.mxu0 %v1337
    %1345 = vmatpush.msra.mxu0 %v1334
    %1346 = vmatpush.msra.mxu0 %v1331
    %1347 = vmatpush.msra.mxu0 %v1328
    %1348 = vmatpush.msra.mxu0 %v1325
    %1349 = vmatpush.msra.mxu0 %v1322
    %1350 = vmatpush.msra.mxu0 %v1319
    %1351 = vmatpush.msra.mxu0 %v1316
    %1352 = vmatpush.msra.mxu0 %v1313
    %1353 = vmatpush.msra.mxu0 %v1310
    %1354 = vmatpush.msra.mxu0 %v1307
    %1355 = vmatpush.msra.mxu0 %v1304
    %1356 = vmatpush.msra.mxu0 %v1301
    %1357 = vmatpush.msra.mxu0 %v1298
    %1358 = vmatpush.msra.mxu0 %v1295
    %1359 = vmatmul.f32.gmra.mxu0 %v1288
    %v1360 = vpop.f32.mrf.mxu0
    %v1361 = vadd.f32 0.0, %v1360
    %1362 = vdwg.mxu0
    %1363 = vmatpush.msra.mxu0 %v1341
    %1364 = vmatpush.msra.mxu0 %v1338
    %1365 = vmatpush.msra.mxu0 %v1335
    %1366 = vmatpush.msra.mxu0 %v1332
    %1367 = vmatpush.msra.mxu0 %v1329
    %1368 = vmatpush.msra.mxu0 %v1326
    %1369 = vmatpush.msra.mxu0 %v1323
    %1370 = vmatpush.msra.mxu0 %v1320
    %1371 = vmatpush.msra.mxu0 %v1317
    %1372 = vmatpush.msra.mxu0 %v1314
    %1373 = vmatpush.msra.mxu0 %v1311
    %1374 = vmatpush.msra.mxu0 %v1308
    %1375 = vmatpush.msra.mxu0 %v1305
    %1376 = vmatpush.msra.mxu0 %v1302
    %1377 = vmatpush.msra.mxu0 %v1299
    %1378 = vmatpush.msra.mxu0 %v1296
    %1379 = vmatmul.f32.gmra.mxu0 %v1288
    %v1380 = vpop.f32.mrf.mxu0
    %v1381 = vadd.f32 0.0, %v1380
    %1382 = vdwg.mxu0
    %1383 = vmatpush.msra.mxu0 %v1342
    %1384 = vmatpush.msra.mxu0 %v1339
    %1385 = vmatpush.msra.mxu0 %v1336
    %1386 = vmatpush.msra.mxu0 %v1333
    %1387 = vmatpush.msra.mxu0 %v1330
    %1388 = vmatpush.msra.mxu0 %v1327
    %1389 = vmatpush.msra.mxu0 %v1324
    %1390 = vmatpush.msra.mxu0 %v1321
    %1391 = vmatpush.msra.mxu0 %v1318
    %1392 = vmatpush.msra.mxu0 %v1315
    %1393 = vmatpush.msra.mxu0 %v1312
    %1394 = vmatpush.msra.mxu0 %v1309
    %1395 = vmatpush.msra.mxu0 %v1306
    %1396 = vmatpush.msra.mxu0 %v1303
    %1397 = vmatpush.msra.mxu0 %v1300
    %1398 = vmatpush.msra.mxu0 %v1297
    %1399 = vmatmul.f32.gmra.mxu0 %v1288
    %v1400 = vpop.f32.mrf.mxu0
    %v1401 = vadd.f32 0.0, %v1400
    %1402 = vdwg.mxu0
    %v1403 = vadd.f32 %v1292, %v1361
    %v1404 = vxor.u32 %v1403, 2147483648
    %v1405 = vmul.f32 %v1404, 1.442695
    %v1406 = vpow.pop %v1405
    %v1407 = vadd.f32 %v1406, 1.0
    %v1408 = vrcp.pop %v1407
    %v1409 = vmul.f32 %v1407, %v1408
    %v1410 = vsub.f32 1.0, %v1409
    %v1411 = vmul.f32 %v1408, %v1410
    %v1412 = vadd.f32 %v1408, %v1411
    %vm1413 = vweird.f32 %v1407
    %vm1414 = vweird.f32 %v1408
    %vm1415 = vmor %vm1413, %vm1414
    %v1416 = vsel %vm1415, %v1408, %v1412
    %v1417 = vand.u32 2147483647, %v1407
    %vm1418 = vcmp.eq.f32.partialorder %v1417, 8.507059e+37
    %v1419 = vand.u32 %v1407, 2147483648
    %v1420 = vor.u32 1.1754944e-38, %v1419
    %v1421 = vsel %vm1418, %v1420, %v1416
    %v1422 = vmul.f32 1.0, %v1421
    %v1423 = vadd.f32 %v1293, %v1381
    %v1424 = vxor.u32 %v1423, 2147483648
    %v1425 = vmul.f32 %v1424, 1.442695
    %v1426 = vpow.pop %v1425
    %v1427 = vadd.f32 %v1426, 1.0
    %v1428 = vrcp.pop %v1427
    %v1429 = vmul.f32 %v1427, %v1428
    %v1430 = vsub.f32 1.0, %v1429
    %v1431 = vmul.f32 %v1428, %v1430
    %v1432 = vadd.f32 %v1428, %v1431
    %vm1433 = vweird.f32 %v1427
    %vm1434 = vweird.f32 %v1428
    %vm1435 = vmor %vm1433, %vm1434
    %v1436 = vsel %vm1435, %v1428, %v1432
    %v1437 = vand.u32 2147483647, %v1427
    %vm1438 = vcmp.eq.f32.partialorder %v1437, 8.507059e+37
    %v1439 = vand.u32 %v1427, 2147483648
    %v1440 = vor.u32 1.1754944e-38, %v1439
    %v1441 = vsel %vm1438, %v1440, %v1436
    %v1442 = vmul.f32 1.0, %v1441
    %v1443 = vmul.f32 %v1422, %v1401
    %v1444 = vadd.f32 %v1294, %v1443
    %v1445 = vtanh.pop %v1444
    %v1446 = vsub.f32 %v1288, %v1445
    %v1447 = vmul.f32 %v1442, %v1446
    %v1448 = vadd.f32 %v1445, %v1447
    %s1449 = scalar_lea.vmem [#allocation3], 48
    %1450 = vst [vmem:[%s1449] sm:$0xff] %v1448
    %s1451 = scalar_lea.vmem [#allocation2], 168
    %v1452 = vld [vmem:[%s1451] sm:$0xff]
    %v1453 = vld [vmem:[%s1451 + $0x8] sm:$0xff]
    %v1454 = vld [vmem:[%s1451 + $0x10] sm:$0xff]
    %v1455 = vld [vmem:[#allocation12] sm:$0xff]
    %v1456 = vld [vmem:[#allocation12 + $0x8] sm:$0xff]
    %v1457 = vld [vmem:[#allocation12 + $0x10] sm:$0xff]
    %v1458 = vld [vmem:[#allocation12 + $0x18] sm:$0xff]
    %v1459 = vld [vmem:[#allocation12 + $0x20] sm:$0xff]
    %v1460 = vld [vmem:[#allocation12 + $0x28] sm:$0xff]
    %v1461 = vld [vmem:[#allocation12 + $0x30] sm:$0xff]
    %v1462 = vld [vmem:[#allocation12 + $0x38] sm:$0xff]
    %v1463 = vld [vmem:[#allocation12 + $0x40] sm:$0xff]
    %v1464 = vld [vmem:[#allocation12 + $0x48] sm:$0xff]
    %v1465 = vld [vmem:[#allocation12 + $0x50] sm:$0xff]
    %v1466 = vld [vmem:[#allocation12 + $0x58] sm:$0xff]
    %v1467 = vld [vmem:[#allocation12 + $0x60] sm:$0xff]
    %v1468 = vld [vmem:[#allocation12 + $0x68] sm:$0xff]
    %v1469 = vld [vmem:[#allocation12 + $0x70] sm:$0xff]
    %v1470 = vld [vmem:[#allocation12 + $0x78] sm:$0xff]
    %v1471 = vld [vmem:[#allocation12 + $0x80] sm:$0xff]
    %v1472 = vld [vmem:[#allocation12 + $0x88] sm:$0xff]
    %v1473 = vld [vmem:[#allocation12 + $0x90] sm:$0xff]
    %v1474 = vld [vmem:[#allocation12 + $0x98] sm:$0xff]
    %v1475 = vld [vmem:[#allocation12 + $0xa0] sm:$0xff]
    %v1476 = vld [vmem:[#allocation12 + $0xa8] sm:$0xff]
    %v1477 = vld [vmem:[#allocation12 + $0xb0] sm:$0xff]
    %v1478 = vld [vmem:[#allocation12 + $0xb8] sm:$0xff]
    %v1479 = vld [vmem:[#allocation12 + $0xc0] sm:$0xff]
    %v1480 = vld [vmem:[#allocation12 + $0xc8] sm:$0xff]
    %v1481 = vld [vmem:[#allocation12 + $0xd0] sm:$0xff]
    %v1482 = vld [vmem:[#allocation12 + $0xd8] sm:$0xff]
    %v1483 = vld [vmem:[#allocation12 + $0xe0] sm:$0xff]
    %v1484 = vld [vmem:[#allocation12 + $0xe8] sm:$0xff]
    %v1485 = vld [vmem:[#allocation12 + $0xf0] sm:$0xff]
    %v1486 = vld [vmem:[#allocation12 + $0xf8] sm:$0xff]
    %v1487 = vld [vmem:[#allocation12 + $0x100] sm:$0xff]
    %v1488 = vld [vmem:[#allocation12 + $0x108] sm:$0xff]
    %v1489 = vld [vmem:[#allocation12 + $0x110] sm:$0xff]
    %v1490 = vld [vmem:[#allocation12 + $0x118] sm:$0xff]
    %v1491 = vld [vmem:[#allocation12 + $0x120] sm:$0xff]
    %v1492 = vld [vmem:[#allocation12 + $0x128] sm:$0xff]
    %v1493 = vld [vmem:[#allocation12 + $0x130] sm:$0xff]
    %v1494 = vld [vmem:[#allocation12 + $0x138] sm:$0xff]
    %v1495 = vld [vmem:[#allocation12 + $0x140] sm:$0xff]
    %v1496 = vld [vmem:[#allocation12 + $0x148] sm:$0xff]
    %v1497 = vld [vmem:[#allocation12 + $0x150] sm:$0xff]
    %v1498 = vld [vmem:[#allocation12 + $0x158] sm:$0xff]
    %v1499 = vld [vmem:[#allocation12 + $0x160] sm:$0xff]
    %v1500 = vld [vmem:[#allocation12 + $0x168] sm:$0xff]
    %v1501 = vld [vmem:[#allocation12 + $0x170] sm:$0xff]
    %v1502 = vld [vmem:[#allocation12 + $0x178] sm:$0xff]
    %1503 = vmatpush.msra.mxu0 %v1500
    %1504 = vmatpush.msra.mxu0 %v1497
    %1505 = vmatpush.msra.mxu0 %v1494
    %1506 = vmatpush.msra.mxu0 %v1491
    %1507 = vmatpush.msra.mxu0 %v1488
    %1508 = vmatpush.msra.mxu0 %v1485
    %1509 = vmatpush.msra.mxu0 %v1482
    %1510 = vmatpush.msra.mxu0 %v1479
    %1511 = vmatpush.msra.mxu0 %v1476
    %1512 = vmatpush.msra.mxu0 %v1473
    %1513 = vmatpush.msra.mxu0 %v1470
    %1514 = vmatpush.msra.mxu0 %v1467
    %1515 = vmatpush.msra.mxu0 %v1464
    %1516 = vmatpush.msra.mxu0 %v1461
    %1517 = vmatpush.msra.mxu0 %v1458
    %1518 = vmatpush.msra.mxu0 %v1455
    %1519 = vmatmul.f32.gmra.mxu0 %v1448
    %v1520 = vpop.f32.mrf.mxu0
    %v1521 = vadd.f32 0.0, %v1520
    %1522 = vdwg.mxu0
    %1523 = vmatpush.msra.mxu0 %v1501
    %1524 = vmatpush.msra.mxu0 %v1498
    %1525 = vmatpush.msra.mxu0 %v1495
    %1526 = vmatpush.msra.mxu0 %v1492
    %1527 = vmatpush.msra.mxu0 %v1489
    %1528 = vmatpush.msra.mxu0 %v1486
    %1529 = vmatpush.msra.mxu0 %v1483
    %1530 = vmatpush.msra.mxu0 %v1480
    %1531 = vmatpush.msra.mxu0 %v1477
    %1532 = vmatpush.msra.mxu0 %v1474
    %1533 = vmatpush.msra.mxu0 %v1471
    %1534 = vmatpush.msra.mxu0 %v1468
    %1535 = vmatpush.msra.mxu0 %v1465
    %1536 = vmatpush.msra.mxu0 %v1462
    %1537 = vmatpush.msra.mxu0 %v1459
    %1538 = vmatpush.msra.mxu0 %v1456
    %1539 = vmatmul.f32.gmra.mxu0 %v1448
    %v1540 = vpop.f32.mrf.mxu0
    %v1541 = vadd.f32 0.0, %v1540
    %1542 = vdwg.mxu0
    %1543 = vmatpush.msra.mxu0 %v1502
    %1544 = vmatpush.msra.mxu0 %v1499
    %1545 = vmatpush.msra.mxu0 %v1496
    %1546 = vmatpush.msra.mxu0 %v1493
    %1547 = vmatpush.msra.mxu0 %v1490
    %1548 = vmatpush.msra.mxu0 %v1487
    %1549 = vmatpush.msra.mxu0 %v1484
    %1550 = vmatpush.msra.mxu0 %v1481
    %1551 = vmatpush.msra.mxu0 %v1478
    %1552 = vmatpush.msra.mxu0 %v1475
    %1553 = vmatpush.msra.mxu0 %v1472
    %1554 = vmatpush.msra.mxu0 %v1469
    %1555 = vmatpush.msra.mxu0 %v1466
    %1556 = vmatpush.msra.mxu0 %v1463
    %1557 = vmatpush.msra.mxu0 %v1460
    %1558 = vmatpush.msra.mxu0 %v1457
    %1559 = vmatmul.f32.gmra.mxu0 %v1448
    %v1560 = vpop.f32.mrf.mxu0
    %v1561 = vadd.f32 0.0, %v1560
    %1562 = vdwg.mxu0
    %v1563 = vadd.f32 %v1452, %v1521
    %v1564 = vxor.u32 %v1563, 2147483648
    %v1565 = vmul.f32 %v1564, 1.442695
    %v1566 = vpow.pop %v1565
    %v1567 = vadd.f32 %v1566, 1.0
    %v1568 = vrcp.pop %v1567
    %v1569 = vmul.f32 %v1567, %v1568
    %v1570 = vsub.f32 1.0, %v1569
    %v1571 = vmul.f32 %v1568, %v1570
    %v1572 = vadd.f32 %v1568, %v1571
    %vm1573 = vweird.f32 %v1567
    %vm1574 = vweird.f32 %v1568
    %vm1575 = vmor %vm1573, %vm1574
    %v1576 = vsel %vm1575, %v1568, %v1572
    %v1577 = vand.u32 2147483647, %v1567
    %vm1578 = vcmp.eq.f32.partialorder %v1577, 8.507059e+37
    %v1579 = vand.u32 %v1567, 2147483648
    %v1580 = vor.u32 1.1754944e-38, %v1579
    %v1581 = vsel %vm1578, %v1580, %v1576
    %v1582 = vmul.f32 1.0, %v1581
    %v1583 = vadd.f32 %v1453, %v1541
    %v1584 = vxor.u32 %v1583, 2147483648
    %v1585 = vmul.f32 %v1584, 1.442695
    %v1586 = vpow.pop %v1585
    %v1587 = vadd.f32 %v1586, 1.0
    %v1588 = vrcp.pop %v1587
    %v1589 = vmul.f32 %v1587, %v1588
    %v1590 = vsub.f32 1.0, %v1589
    %v1591 = vmul.f32 %v1588, %v1590
    %v1592 = vadd.f32 %v1588, %v1591
    %vm1593 = vweird.f32 %v1587
    %vm1594 = vweird.f32 %v1588
    %vm1595 = vmor %vm1593, %vm1594
    %v1596 = vsel %vm1595, %v1588, %v1592
    %v1597 = vand.u32 2147483647, %v1587
    %vm1598 = vcmp.eq.f32.partialorder %v1597, 8.507059e+37
    %v1599 = vand.u32 %v1587, 2147483648
    %v1600 = vor.u32 1.1754944e-38, %v1599
    %v1601 = vsel %vm1598, %v1600, %v1596
    %v1602 = vmul.f32 1.0, %v1601
    %v1603 = vmul.f32 %v1582, %v1561
    %v1604 = vadd.f32 %v1454, %v1603
    %v1605 = vtanh.pop %v1604
    %v1606 = vsub.f32 %v1448, %v1605
    %v1607 = vmul.f32 %v1602, %v1606
    %v1608 = vadd.f32 %v1605, %v1607
    %s1609 = scalar_lea.vmem [#allocation3], 56
    %1610 = vst [vmem:[%s1609] sm:$0xff] %v1608
    %1611 = vst [vmem:[#allocation16] sm:$0xff] %v1608
    %v1612 = vld [vmem:[#allocation3] sm:$0xff]
    %v1613 = vld [vmem:[#allocation3 + $0x8] sm:$0xff]
    %v1614 = vld [vmem:[#allocation3 + $0x10] sm:$0xff]
    %v1615 = vld [vmem:[#allocation3 + $0x18] sm:$0xff]
    %v1616 = vld [vmem:[#allocation3 + $0x20] sm:$0xff]
    %v1617 = vld [vmem:[#allocation3 + $0x28] sm:$0xff]
    %v1618 = vld [vmem:[#allocation3 + $0x30] sm:$0xff]
    %v1619 = vld [vmem:[#allocation3 + $0x38] sm:$0xff]
    %v1620 = vld [vmem:[#allocation13] sm:$0xff]
    %v1621 = vld [vmem:[#allocation13 + $0x8] sm:$0xff]
    %v1622 = vld [vmem:[#allocation13 + $0x10] sm:$0xff]
    %v1623 = vld [vmem:[#allocation13 + $0x18] sm:$0xff]
    %v1624 = vld [vmem:[#allocation13 + $0x20] sm:$0xff]
    %v1625 = vld [vmem:[#allocation13 + $0x28] sm:$0xff]
    %v1626 = vld [vmem:[#allocation13 + $0x30] sm:$0xff]
    %v1627 = vld [vmem:[#allocation13 + $0x38] sm:$0xff]
    %v1628 = vld [vmem:[#allocation13 + $0x40] sm:$0xff]
    %v1629 = vld [vmem:[#allocation13 + $0x48] sm:$0xff]
    %v1630 = vld [vmem:[#allocation13 + $0x50] sm:$0xff]
    %v1631 = vld [vmem:[#allocation13 + $0x58] sm:$0xff]
    %v1632 = vld [vmem:[#allocation13 + $0x60] sm:$0xff]
    %v1633 = vld [vmem:[#allocation13 + $0x68] sm:$0xff]
    %v1634 = vld [vmem:[#allocation13 + $0x70] sm:$0xff]
    %v1635 = vld [vmem:[#allocation13 + $0x78] sm:$0xff]
    %v1636 = vld [vmem:[%s6] sm:$0x1]
    %v1638 = vperm.slane %v1636, 0
    %1640 = vmatpush.msra.mxu0 %v1635
    %1641 = vmatpush.msra.mxu0 %v1634
    %1642 = vmatpush.msra.mxu0 %v1633
    %1643 = vmatpush.msra.mxu0 %v1632
    %1644 = vmatpush.msra.mxu0 %v1631
    %1645 = vmatpush.msra.mxu0 %v1630
    %1646 = vmatpush.msra.mxu0 %v1629
    %1647 = vmatpush.msra.mxu0 %v1628
    %1648 = vmatpush.msra.mxu0 %v1627
    %1649 = vmatpush.msra.mxu0 %v1626
    %1650 = vmatpush.msra.mxu0 %v1625
    %1651 = vmatpush.msra.mxu0 %v1624
    %1652 = vmatpush.msra.mxu0 %v1623
    %1653 = vmatpush.msra.mxu0 %v1622
    %1654 = vmatpush.msra.mxu0 %v1621
    %1655 = vmatpush.msra.mxu0 %v1620
    %1656 = vmatmul.f32.gmra.mxu0 %v1612
    %v1657 = vpop.f32.mrf.mxu0
    %v1658 = vadd.f32 %v1638, %v1657
    %1659 = vmatmul.f32.gmra.mxu0 %v1613
    %v1660 = vpop.f32.mrf.mxu0
    %v1661 = vadd.f32 %v1638, %v1660
    %1662 = vmatmul.f32.gmra.mxu0 %v1614
    %v1663 = vpop.f32.mrf.mxu0
    %v1664 = vadd.f32 %v1638, %v1663
    %1665 = vmatmul.f32.gmra.mxu0 %v1615
    %v1666 = vpop.f32.mrf.mxu0
    %v1667 = vadd.f32 %v1638, %v1666
    %1668 = vmatmul.f32.gmra.mxu0 %v1616
    %v1669 = vpop.f32.mrf.mxu0
    %v1670 = vadd.f32 %v1638, %v1669
    %1671 = vmatmul.f32.gmra.mxu0 %v1617
    %v1672 = vpop.f32.mrf.mxu0
    %v1673 = vadd.f32 %v1638, %v1672
    %1674 = vmatmul.f32.gmra.mxu0 %v1618
    %v1675 = vpop.f32.mrf.mxu0
    %v1676 = vadd.f32 %v1638, %v1675
    %1677 = vmatmul.f32.gmra.mxu0 %v1619
    %v1678 = vpop.f32.mrf.mxu0
    %v1679 = vadd.f32 %v1638, %v1678
    %1680 = vdwg.mxu0
    %v1681 = vtanh.pop %v1658
    %v1682 = vtanh.pop %v1661
    %v1683 = vtanh.pop %v1664
    %v1684 = vtanh.pop %v1667
    %v1685 = vtanh.pop %v1670
    %v1686 = vtanh.pop %v1673
    %v1687 = vtanh.pop %v1676
    %v1688 = vtanh.pop %v1679
    %1689 = vst [vmem:[#allocation15] sm:$0xff] %v1681
    %1690 = vst [vmem:[#allocation15 + $0x8] sm:$0xff] %v1682
    %1691 = vst [vmem:[#allocation15 + $0x10] sm:$0xff] %v1683
    %1692 = vst [vmem:[#allocation15 + $0x18] sm:$0xff] %v1684
    %1693 = vst [vmem:[#allocation15 + $0x20] sm:$0xff] %v1685
    %1694 = vst [vmem:[#allocation15 + $0x28] sm:$0xff] %v1686
    %1695 = vst [vmem:[#allocation15 + $0x30] sm:$0xff] %v1687
    %1696 = vst [vmem:[#allocation15 + $0x38] sm:$0xff] %v1688
    // Predicated region
    $region58: #{tpu_custom_call.1} parent=1 // pred_check
      _
    $region59: #{tpu_custom_call.1} parent=1 // pred_check_branch
      %1698 = sbr.rel (0) target = $region61
    $region60: #{tpu_custom_call.1} parent=1 // pred_region
      %1700 = vsyncadd [#allocation6], 0
      %s1701 = sshll.u32 [#allocation15], 4
      %s1702 = int_to_ptr.vmem [resolvable:$true] %s1701
      %s1703 = sshll.u32 %s7, 4
      %s1704 = int_to_ptr.hbm [resolvable:$true] %s1703
      %1709 = dma.vmem_to_hbm [thread:$0]  %s1702, 1024, %s1704, [#allocation6], 128, 128, 8
    $region61: #{tpu_custom_call.1} parent=1 // pred_fallthru
      _
    // Predicated region
    $region62: #{tpu_custom_call.1} parent=1 // pred_check
      _
    $region63: #{tpu_custom_call.1} parent=1 // pred_check_branch
      %1711 = sbr.rel (0) target = $region65
    $region64: #{tpu_custom_call.1} parent=1 // pred_region
      %1713 = vsyncadd [#allocation17], 0
      %s1715 = sshll.u32 [#allocation16], 4
      %s1716 = int_to_ptr.vmem [resolvable:$true] %s1715
      %s1717 = sshll.u32 %s8, 4
      %s1718 = int_to_ptr.hbm [resolvable:$true] %s1717
      %1720 = dma.vmem_to_hbm [thread:$0]  %s1716, 128, %s1718, [#allocation17]
    $region65: #{tpu_custom_call.1} parent=1 // pred_fallthru
      _
    // Predicated region
    $region66: #{tpu_custom_call.1} parent=1 // pred_check
      _
    $region67: #{tpu_custom_call.1} parent=1 // pred_check_branch
      %1722 = sbr.rel (0) target = $region69
    $region68: #{tpu_custom_call.1} parent=1 // pred_region
      %1724 = dma.done [#allocation6], 1024
    $region69: #{tpu_custom_call.1} parent=1 // pred_fallthru
      _
    // Predicated region
    $region70: #{tpu_custom_call.1} parent=1 // pred_check
      _
    $region71: #{tpu_custom_call.1} parent=1 // pred_check_branch
      %1726 = sbr.rel (0) target = $region73
    $region72: #{tpu_custom_call.1} parent=1 // pred_region
      %1728 = dma.done [#allocation17], 128
    $region73: #{tpu_custom_call.1} parent=1 // pred_fallthru
      _
    %1729 = vsyncpa [#allocation5], 1
    %1730 = vsyncpa [#allocation8], 1
    %1731 = vsyncpa [#allocation11], 1
    %1732 = vsyncpa [#allocation14], 1
    %1733 = vsyncpa [#allocation6], 1
    %1734 = vsyncpa [#allocation17], 1

</llo_original>
